<compile_context>
chip_gen: v6e
topology: v6e:2x2x1
jax: 0.10.0
libtpu: 0.0.40
codegen_flags: <defaults>
</compile_context>

<pallas_src>
import functools

import jax
import jax.numpy as jnp
from jax import lax
from jax.experimental import pallas as pl
from jax.experimental.pallas import tpu as pltpu

BN_EPS = 1e-5
LANE = 128
SUBLANE = 8


def _round_up(x, m):
    return (x + m - 1) // m * m


def _lane_pad(c):
    return _round_up(max(int(c), 1), LANE)


def _pick_tile_h(N, H, W, Cin, Cout, budget_bytes=10 * 1024 * 1024):
    """Largest divisor of H whose per-block VMEM estimate fits the budget,
    shrunk (when possible) so the (N, H/TH) grid has >= 8 steps to pipeline."""
    WP = W + 2
    cin_l, cout_l = _lane_pad(Cin), _lane_pad(Cout)

    def block_bytes(th):
        rin = _round_up((th + 2) * WP + 2, SUBLANE)
        rout = th * WP
        # bf16 input block + f32 per-tile upcast + f32 acc + f32 output block,
        # all lane-padded to 128 in VMEM.
        return rin * cin_l * (2 + 4) + rout * cout_l * (4 + 4)

    divs = [d for d in range(1, H + 1) if H % d == 0]
    feasible = [d for d in divs if block_bytes(d) <= budget_bytes] or [1]
    deep = [d for d in feasible if N * (H // d) >= 8]
    return max(deep) if deep else max(feasible)


def _conv3x3_tile(x_tile_bf16, w_ref, *, rout, wp, cout_pad):
    """3x3 conv on one flattened padded row-tile via 9 shifted-slab matmuls.

    x_tile_bf16 : (RIN_T, Cin)       bf16, (TH+2) padded rows flattened with
                                     width (W+2); trailing zero rows appended.
    w_ref       : (9, Cin, COUT_PAD) bf16 per-tap weight matrices.
    returns     : (rout, COUT_PAD)   f32 conv output in padded-width layout.
    """
    # Per-tile f32 upcast so the nine sublane-unaligned tap slices are plain
    # 32-bit relayouts (XLU work on an otherwise idle unit).
    x32 = x_tile_bf16.astype(jnp.float32)
    acc = jnp.zeros((rout, cout_pad), jnp.float32)
    for dh in range(3):
        for dw in range(3):
            off = dh * wp + dw
            patch = x32[off:off + rout, :].astype(jnp.bfloat16)
            acc = acc + jnp.dot(patch, w_ref[dh * 3 + dw],
                                preferred_element_type=jnp.float32)
    return acc


def _conv_stats_kernel(x_ref, w_ref, part_ref, *, th, W, wp):
    """Pass 1: conv on one row tile -> per-tile partial (sum, sumsq)."""
    rout = th * wp
    cout_pad = w_ref.shape[-1]
    acc = _conv3x3_tile(x_ref[0, 0], w_ref, rout=rout, wp=wp,
                        cout_pad=cout_pad)
    # Exclude the 2 wrap-around columns per padded-width row from the stats.
    ridx = lax.broadcasted_iota(jnp.int32, (rout, 1), 0)
    valid = ((ridx % wp) < W).astype(jnp.float32)
    ym = acc * valid
    s1 = jnp.sum(ym, axis=0, keepdims=True)          # sum(y)
    s2 = jnp.sum(ym * acc, axis=0, keepdims=True)    # sum(y^2)
    part_ref[0, 0] = jnp.concatenate([s1, s2], axis=0)


def _conv_bn_relu_kernel(x_ref, w_ref, ss_ref, o_ref, *, th, wp):
    """Pass 2: recompute conv, apply folded BN scale/shift + ReLU, store only
    the real Cout channels (narrow masked store beats 16x padded HBM bytes)."""
    rout = th * wp
    cout_pad = w_ref.shape[-1]
    cout = o_ref.shape[-1]
    acc = _conv3x3_tile(x_ref[0, 0], w_ref, rout=rout, wp=wp,
                        cout_pad=cout_pad)
    scale = ss_ref[0:1, :cout]
    shift = ss_ref[1:2, :cout]
    o_ref[0, 0] = jnp.maximum(acc[:, :cout] * scale + shift, 0.0)


def cbr_forward(x_nchw, conv_w, conv_b, bn_gamma, bn_beta):
    """CBR forward.  x_nchw: (N, Cin, H, W); conv_w: (Cout, Cin, 3, 3).

    conv_b is accepted for API parity but intentionally unused: training-mode
    BatchNorm subtracts the batch mean, which cancels the bias exactly.
    """
    del conv_b
    N, Cin, H, W = x_nchw.shape
    Cout = conv_w.shape[0]
    WP = W + 2
    TH = _pick_tile_h(N, H, W, Cin, Cout)
    HT = H // TH
    ROUT_T = TH * WP
    RIN_T = _round_up((TH + 2) * WP + 2, SUBLANE)
    COUT_PAD = _lane_pad(Cout)
    inv_count = 1.0 / float(N * H * W)

    # ---- layout prep (cheap XLA glue, no im2col) ---------------------------
    x = jnp.transpose(x_nchw, (0, 2, 3, 1)).astype(jnp.float32)      # NHWC
    xp = jnp.pad(x, ((0, 0), (1, 1), (1, 1), (0, 0)))                # H+2, W+2
    # Halo-duplicated row tiles: tile t covers padded rows [t*TH, t*TH+TH+2).
    rows = jnp.arange(HT)[:, None] * TH + jnp.arange(TH + 2)[None, :]
    xt = xp[:, rows]                                  # (N, HT, TH+2, WP, Cin)
    xt = xt.reshape(N, HT, (TH + 2) * WP, Cin)
    xt = jnp.pad(xt, ((0, 0), (0, 0), (0, RIN_T - (TH + 2) * WP), (0, 0)))
    xt = xt.astype(jnp.bfloat16)

    # (Cout, Cin, 3, 3) -> (9, Cin, COUT_PAD) per-tap weight matrices, bf16.
    w_taps = jnp.transpose(conv_w, (2, 3, 1, 0)).reshape(9, Cin, Cout)
    w_taps = jnp.pad(w_taps, ((0, 0), (0, 0), (0, COUT_PAD - Cout)))
    w_taps = w_taps.astype(jnp.bfloat16)

    # VMEM limit from actual block sizes (x2 double-buffer) + in-kernel temps.
    in_blk = RIN_T * _lane_pad(Cin) * 2
    out_blk = ROUT_T * _lane_pad(Cout) * 4
    w_blk = 9 * _round_up(Cin, SUBLANE) * COUT_PAD * 2
    temps = RIN_T * _lane_pad(Cin) * 4 + 3 * ROUT_T * COUT_PAD * 4
    vmem_limit = int(min(64 * 1024 * 1024,
                         max(32 * 1024 * 1024,
                             2 * (2 * (in_blk + out_blk) + w_blk + temps))))

    grid = (N, HT)
    x_spec = pl.BlockSpec((1, 1, RIN_T, Cin), lambda n, t: (n, t, 0, 0))
    w_spec = pl.BlockSpec((9, Cin, COUT_PAD), lambda n, t: (0, 0, 0))

    # ---- pass 1: conv + per-tile partial BN statistics (fully parallel) ----
    kernel_a = functools.partial(_conv_stats_kernel, th=TH, W=W, wp=WP)
    partials = pl.pallas_call(
        kernel_a,
        out_shape=jax.ShapeDtypeStruct((N, HT, 2, COUT_PAD), jnp.float32),
        grid=grid,
        in_specs=[x_spec, w_spec],
        out_specs=pl.BlockSpec((1, 1, 2, COUT_PAD), lambda n, t: (n, t, 0, 0)),
        compiler_params=pltpu.CompilerParams(
            dimension_semantics=("parallel", "parallel"),
            vmem_limit_bytes=vmem_limit),
    )(xt, w_taps)

    # ---- tiny combine + gamma/beta fold (XLA glue on (N*HT, 2, 128)) -------
    sums = jnp.sum(partials, axis=(0, 1))             # (2, COUT_PAD)
    mean = sums[0] * inv_count
    ex2 = sums[1] * inv_count
    # TODO(synk): a shifted/centered sumsq (Welford over tiles) would be more
    # robust than E[y^2]-mean^2 when |mean| >> std; clamp covers the rest.
    var = jnp.maximum(ex2 - mean * mean, 0.0)
    gamma_p = jnp.pad(bn_gamma.astype(jnp.float32), (0, COUT_PAD - Cout))
    beta_p = jnp.pad(bn_beta.astype(jnp.float32), (0, COUT_PAD - Cout))
    scale = gamma_p * lax.rsqrt(var + BN_EPS)
    shift = beta_p - mean * scale
    scale_shift = jnp.stack([scale, shift])            # (2, COUT_PAD)

    # ---- pass 2: recompute conv, folded BN + ReLU, real-channel stores -----
    kernel_b = functools.partial(_conv_bn_relu_kernel, th=TH, wp=WP)
    out_t = pl.pallas_call(
        kernel_b,
        out_shape=jax.ShapeDtypeStruct((N, HT, ROUT_T, Cout), jnp.float32),
        grid=grid,
        in_specs=[x_spec, w_spec,
                  pl.BlockSpec((2, COUT_PAD), lambda n, t: (0, 0))],
        out_specs=pl.BlockSpec((1, 1, ROUT_T, Cout), lambda n, t: (n, t, 0, 0)),
        compiler_params=pltpu.CompilerParams(
            dimension_semantics=("parallel", "parallel"),
            vmem_limit_bytes=vmem_limit),
    )(xt, w_taps, scale_shift)

    # Drop the 2 wrap columns per row and go back to NCHW.  This XLA pass is
    # fused with the transpose the NCHW API requires anyway and now runs on a
    # real-Cout-sized tensor (no 128-lane padding).
    out = out_t.reshape(N, HT, TH, WP, Cout)[:, :, :, :W, :]
    out = out.reshape(N, H, W, Cout)
    return jnp.transpose(out, (0, 3, 1, 2))


if __name__ == "__main__":
    key = jax.random.PRNGKey(0)
    N, Cin, H, W = 2, 4, 16, 16
    Cout = 8

    k_x, k_w, k_b = jax.random.split(key, 3)
    x = jax.random.normal(k_x, (N, Cin, H, W), dtype=jnp.float32)

    # Deterministic params (shapes per nn.Conv2d / nn.BatchNorm2d defaults).
    fan_in = Cin * 3 * 3
    bound = 1.0 / (fan_in ** 0.5)
    conv_w = jax.random.uniform(k_w, (Cout, Cin, 3, 3), jnp.float32,
                                -bound, bound)
    conv_b = jax.random.uniform(k_b, (Cout,), jnp.float32, -bound, bound)
    bn_gamma = jnp.ones((Cout,), jnp.float32)    # BN default: weight = 1
    bn_beta = jnp.zeros((Cout,), jnp.float32)    # BN default: bias = 0

    out = jax.jit(cbr_forward)(x, conv_w, conv_b, bn_gamma, bn_beta)
    jax.block_until_ready(out)
    assert out.shape == (N, Cout, H, W)

    # f32 reference: conv (+bias) -> training-mode BN -> ReLU.
    y_ref = lax.conv_general_dilated(
        x, conv_w, window_strides=(1, 1), padding=((1, 1), (1, 1)),
        dimension_numbers=("NCHW", "OIHW", "NCHW"))
    y_ref = y_ref + conv_b[None, :, None, None]
    mean = jnp.mean(y_ref, axis=(0, 2, 3), keepdims=True)
    var = jnp.mean((y_ref - mean) ** 2, axis=(0, 2, 3), keepdims=True)
    ref = jnp.maximum(
        (y_ref - mean) * lax.rsqrt(var + BN_EPS)
        * bn_gamma[None, :, None, None] + bn_beta[None, :, None, None], 0.0)
    max_err = float(jnp.max(jnp.abs(out - ref)))
    assert max_err < 5e-2, max_err   # bf16-matmul-level tolerance

    print("KERNEL_OK")
</pallas_src>

<mosaic_0001>
module attributes {stable_mosaic.version = 11 : i64} {
  func.func @_conv_bn_relu_kernel(%arg0: i32, %arg1: i32, %arg2: memref<1x1x112x4xbf16, #tpu.memory_space<vmem>>, %arg3: memref<9x4x128xbf16, #tpu.memory_space<vmem>>, %arg4: memref<2x128xf32, #tpu.memory_space<vmem>>, %arg5: memref<1x1x72x8xf32, #tpu.memory_space<vmem>>) attributes {dimension_semantics = [#tpu.dimension_semantics<parallel>, #tpu.dimension_semantics<parallel>], iteration_bounds = array<i64: 2, 4>, scalar_prefetch = 0 : i64, scratch_operands = 0 : i64, tpu.core_type = #tpu.core_type<tc>, window_params = [{transform_indices = @transform_0, window_bounds = array<i64: 1, 1, 112, 4>}, {pipeline_mode = #tpu.pipeline_mode<synchronous>, transform_indices = @transform_1, window_bounds = array<i64: 9, 4, 128>}, {pipeline_mode = #tpu.pipeline_mode<synchronous>, transform_indices = @transform_2, window_bounds = array<i64: 2, 128>}, {transform_indices = @transform_3, window_bounds = array<i64: 1, 1, 72, 8>}]} {
    %c0 = arith.constant 0 : index
    %c0_0 = arith.constant 0 : index
    %c0_1 = arith.constant 0 : index
    %c0_2 = arith.constant 0 : index
    %0 = vector.load %arg2[%c0, %c0_0, %c0_1, %c0_2] : memref<1x1x112x4xbf16, #tpu.memory_space<vmem>>, vector<1x1x112x4xbf16>
    %1 = vector.shape_cast %0 : vector<1x1x112x4xbf16> to vector<112x4xbf16>
    %2 = arith.extf %1 : vector<112x4xbf16> to vector<112x4xf32>
    %cst = arith.constant 0.000000e+00 : f32
    %3 = vector.broadcast %cst : f32 to vector<72x128xf32>
    %4 = vector.extract_strided_slice %2 {offsets = [0, 0], sizes = [72, 4], strides = [1, 1]} : vector<112x4xf32> to vector<72x4xf32>
    %5 = arith.truncf %4 : vector<72x4xf32> to vector<72x4xbf16>
    %c0_3 = arith.constant 0 : index
    %c0_4 = arith.constant 0 : index
    %c0_5 = arith.constant 0 : index
    %6 = vector.load %arg3[%c0_3, %c0_4, %c0_5] : memref<9x4x128xbf16, #tpu.memory_space<vmem>>, vector<1x4x128xbf16>
    %7 = vector.shape_cast %6 : vector<1x4x128xbf16> to vector<4x128xbf16>
    %cst_6 = arith.constant dense<0.000000e+00> : vector<72x128xf32>
    %8 = tpu.matmul %5, %7, %cst_6 {dimension_numbers = #tpu.dot_dimension_numbers<[1], [0], [0], [1], [0, 0, 1, 1], [], []>} : vector<72x4xbf16>, vector<4x128xbf16>, vector<72x128xf32> -> vector<72x128xf32>
    %9 = arith.addf %3, %8 : vector<72x128xf32>
    %10 = vector.extract_strided_slice %2 {offsets = [1, 0], sizes = [72, 4], strides = [1, 1]} : vector<112x4xf32> to vector<72x4xf32>
    %11 = arith.truncf %10 : vector<72x4xf32> to vector<72x4xbf16>
    %c1 = arith.constant 1 : index
    %c0_7 = arith.constant 0 : index
    %c0_8 = arith.constant 0 : index
    %12 = vector.load %arg3[%c1, %c0_7, %c0_8] : memref<9x4x128xbf16, #tpu.memory_space<vmem>>, vector<1x4x128xbf16>
    %13 = vector.shape_cast %12 : vector<1x4x128xbf16> to vector<4x128xbf16>
    %cst_9 = arith.constant dense<0.000000e+00> : vector<72x128xf32>
    %14 = tpu.matmul %11, %13, %cst_9 {dimension_numbers = #tpu.dot_dimension_numbers<[1], [0], [0], [1], [0, 0, 1, 1], [], []>} : vector<72x4xbf16>, vector<4x128xbf16>, vector<72x128xf32> -> vector<72x128xf32>
    %15 = arith.addf %9, %14 : vector<72x128xf32>
    %16 = vector.extract_strided_slice %2 {offsets = [2, 0], sizes = [72, 4], strides = [1, 1]} : vector<112x4xf32> to vector<72x4xf32>
    %17 = arith.truncf %16 : vector<72x4xf32> to vector<72x4xbf16>
    %c2 = arith.constant 2 : index
    %c0_10 = arith.constant 0 : index
    %c0_11 = arith.constant 0 : index
    %18 = vector.load %arg3[%c2, %c0_10, %c0_11] : memref<9x4x128xbf16, #tpu.memory_space<vmem>>, vector<1x4x128xbf16>
    %19 = vector.shape_cast %18 : vector<1x4x128xbf16> to vector<4x128xbf16>
    %cst_12 = arith.constant dense<0.000000e+00> : vector<72x128xf32>
    %20 = tpu.matmul %17, %19, %cst_12 {dimension_numbers = #tpu.dot_dimension_numbers<[1], [0], [0], [1], [0, 0, 1, 1], [], []>} : vector<72x4xbf16>, vector<4x128xbf16>, vector<72x128xf32> -> vector<72x128xf32>
    %21 = arith.addf %15, %20 : vector<72x128xf32>
    %22 = vector.extract_strided_slice %2 {offsets = [18, 0], sizes = [72, 4], strides = [1, 1]} : vector<112x4xf32> to vector<72x4xf32>
    %23 = arith.truncf %22 : vector<72x4xf32> to vector<72x4xbf16>
    %c3 = arith.constant 3 : index
    %c0_13 = arith.constant 0 : index
    %c0_14 = arith.constant 0 : index
    %24 = vector.load %arg3[%c3, %c0_13, %c0_14] : memref<9x4x128xbf16, #tpu.memory_space<vmem>>, vector<1x4x128xbf16>
    %25 = vector.shape_cast %24 : vector<1x4x128xbf16> to vector<4x128xbf16>
    %cst_15 = arith.constant dense<0.000000e+00> : vector<72x128xf32>
    %26 = tpu.matmul %23, %25, %cst_15 {dimension_numbers = #tpu.dot_dimension_numbers<[1], [0], [0], [1], [0, 0, 1, 1], [], []>} : vector<72x4xbf16>, vector<4x128xbf16>, vector<72x128xf32> -> vector<72x128xf32>
    %27 = arith.addf %21, %26 : vector<72x128xf32>
    %28 = vector.extract_strided_slice %2 {offsets = [19, 0], sizes = [72, 4], strides = [1, 1]} : vector<112x4xf32> to vector<72x4xf32>
    %29 = arith.truncf %28 : vector<72x4xf32> to vector<72x4xbf16>
    %c4 = arith.constant 4 : index
    %c0_16 = arith.constant 0 : index
    %c0_17 = arith.constant 0 : index
    %30 = vector.load %arg3[%c4, %c0_16, %c0_17] : memref<9x4x128xbf16, #tpu.memory_space<vmem>>, vector<1x4x128xbf16>
    %31 = vector.shape_cast %30 : vector<1x4x128xbf16> to vector<4x128xbf16>
    %cst_18 = arith.constant dense<0.000000e+00> : vector<72x128xf32>
    %32 = tpu.matmul %29, %31, %cst_18 {dimension_numbers = #tpu.dot_dimension_numbers<[1], [0], [0], [1], [0, 0, 1, 1], [], []>} : vector<72x4xbf16>, vector<4x128xbf16>, vector<72x128xf32> -> vector<72x128xf32>
    %33 = arith.addf %27, %32 : vector<72x128xf32>
    %34 = vector.extract_strided_slice %2 {offsets = [20, 0], sizes = [72, 4], strides = [1, 1]} : vector<112x4xf32> to vector<72x4xf32>
    %35 = arith.truncf %34 : vector<72x4xf32> to vector<72x4xbf16>
    %c5 = arith.constant 5 : index
    %c0_19 = arith.constant 0 : index
    %c0_20 = arith.constant 0 : index
    %36 = vector.load %arg3[%c5, %c0_19, %c0_20] : memref<9x4x128xbf16, #tpu.memory_space<vmem>>, vector<1x4x128xbf16>
    %37 = vector.shape_cast %36 : vector<1x4x128xbf16> to vector<4x128xbf16>
    %cst_21 = arith.constant dense<0.000000e+00> : vector<72x128xf32>
    %38 = tpu.matmul %35, %37, %cst_21 {dimension_numbers = #tpu.dot_dimension_numbers<[1], [0], [0], [1], [0, 0, 1, 1], [], []>} : vector<72x4xbf16>, vector<4x128xbf16>, vector<72x128xf32> -> vector<72x128xf32>
    %39 = arith.addf %33, %38 : vector<72x128xf32>
    %40 = vector.extract_strided_slice %2 {offsets = [36, 0], sizes = [72, 4], strides = [1, 1]} : vector<112x4xf32> to vector<72x4xf32>
    %41 = arith.truncf %40 : vector<72x4xf32> to vector<72x4xbf16>
    %c6 = arith.constant 6 : index
    %c0_22 = arith.constant 0 : index
    %c0_23 = arith.constant 0 : index
    %42 = vector.load %arg3[%c6, %c0_22, %c0_23] : memref<9x4x128xbf16, #tpu.memory_space<vmem>>, vector<1x4x128xbf16>
    %43 = vector.shape_cast %42 : vector<1x4x128xbf16> to vector<4x128xbf16>
    %cst_24 = arith.constant dense<0.000000e+00> : vector<72x128xf32>
    %44 = tpu.matmul %41, %43, %cst_24 {dimension_numbers = #tpu.dot_dimension_numbers<[1], [0], [0], [1], [0, 0, 1, 1], [], []>} : vector<72x4xbf16>, vector<4x128xbf16>, vector<72x128xf32> -> vector<72x128xf32>
    %45 = arith.addf %39, %44 : vector<72x128xf32>
    %46 = vector.extract_strided_slice %2 {offsets = [37, 0], sizes = [72, 4], strides = [1, 1]} : vector<112x4xf32> to vector<72x4xf32>
    %47 = arith.truncf %46 : vector<72x4xf32> to vector<72x4xbf16>
    %c7 = arith.constant 7 : index
    %c0_25 = arith.constant 0 : index
    %c0_26 = arith.constant 0 : index
    %48 = vector.load %arg3[%c7, %c0_25, %c0_26] : memref<9x4x128xbf16, #tpu.memory_space<vmem>>, vector<1x4x128xbf16>
    %49 = vector.shape_cast %48 : vector<1x4x128xbf16> to vector<4x128xbf16>
    %cst_27 = arith.constant dense<0.000000e+00> : vector<72x128xf32>
    %50 = tpu.matmul %47, %49, %cst_27 {dimension_numbers = #tpu.dot_dimension_numbers<[1], [0], [0], [1], [0, 0, 1, 1], [], []>} : vector<72x4xbf16>, vector<4x128xbf16>, vector<72x128xf32> -> vector<72x128xf32>
    %51 = arith.addf %45, %50 : vector<72x128xf32>
    %52 = vector.extract_strided_slice %2 {offsets = [38, 0], sizes = [72, 4], strides = [1, 1]} : vector<112x4xf32> to vector<72x4xf32>
    %53 = arith.truncf %52 : vector<72x4xf32> to vector<72x4xbf16>
    %c8 = arith.constant 8 : index
    %c0_28 = arith.constant 0 : index
    %c0_29 = arith.constant 0 : index
    %54 = vector.load %arg3[%c8, %c0_28, %c0_29] : memref<9x4x128xbf16, #tpu.memory_space<vmem>>, vector<1x4x128xbf16>
    %55 = vector.shape_cast %54 : vector<1x4x128xbf16> to vector<4x128xbf16>
    %cst_30 = arith.constant dense<0.000000e+00> : vector<72x128xf32>
    %56 = tpu.matmul %53, %55, %cst_30 {dimension_numbers = #tpu.dot_dimension_numbers<[1], [0], [0], [1], [0, 0, 1, 1], [], []>} : vector<72x4xbf16>, vector<4x128xbf16>, vector<72x128xf32> -> vector<72x128xf32>
    %57 = arith.addf %51, %56 : vector<72x128xf32>
    %c0_31 = arith.constant 0 : index
    %c0_32 = arith.constant 0 : index
    %58 = vector.load %arg4[%c0_31, %c0_32] : memref<2x128xf32, #tpu.memory_space<vmem>>, vector<1x8xf32>
    %c1_33 = arith.constant 1 : index
    %c0_34 = arith.constant 0 : index
    %59 = vector.load %arg4[%c1_33, %c0_34] : memref<2x128xf32, #tpu.memory_space<vmem>>, vector<1x8xf32>
    %60 = vector.extract_strided_slice %57 {offsets = [0, 0], sizes = [72, 8], strides = [1, 1]} : vector<72x128xf32> to vector<72x8xf32>
    %61 = vector.broadcast %58 : vector<1x8xf32> to vector<72x8xf32>
    %62 = arith.mulf %60, %61 : vector<72x8xf32>
    %63 = vector.broadcast %59 : vector<1x8xf32> to vector<72x8xf32>
    %64 = arith.addf %62, %63 : vector<72x8xf32>
    %cst_35 = arith.constant 0.000000e+00 : f32
    %65 = vector.broadcast %cst_35 : f32 to vector<72x8xf32>
    %66 = arith.maximumf %64, %65 : vector<72x8xf32>
    %c0_36 = arith.constant 0 : index
    %c0_37 = arith.constant 0 : index
    %c0_38 = arith.constant 0 : index
    %c0_39 = arith.constant 0 : index
    %67 = vector.load %arg5[%c0_36, %c0_37, %c0_38, %c0_39] : memref<1x1x72x8xf32, #tpu.memory_space<vmem>>, vector<1x1x72x8xf32>
    %68 = vector.shape_cast %67 : vector<1x1x72x8xf32> to vector<72x8xf32>
    %69 = vector.shape_cast %66 : vector<72x8xf32> to vector<1x1x72x8xf32>
    tpu.vector_store %arg5[%c0_36, %c0_37, %c0_38, %c0_39], %69 {strides = array<i32>} : memref<1x1x72x8xf32, #tpu.memory_space<vmem>>, vector<1x1x72x8xf32>,
    return
  }
  func.func @transform_0(%arg0: i32, %arg1: i32) -> (i32, i32, i32, i32) {
    %c0_i32 = arith.constant 0 : i32
    %c0_i32_0 = arith.constant 0 : i32
    %c0_i32_1 = arith.constant 0 : i32
    return %arg0, %arg1, %c0_i32, %c0_i32_0 : i32, i32, i32, i32
  }
  func.func @transform_1(%arg0: i32, %arg1: i32) -> (i32, i32, i32) {
    %c0_i32 = arith.constant 0 : i32
    %c0_i32_0 = arith.constant 0 : i32
    %c0_i32_1 = arith.constant 0 : i32
    %c0_i32_2 = arith.constant 0 : i32
    return %c0_i32, %c0_i32_0, %c0_i32_1 : i32, i32, i32
  }
  func.func @transform_2(%arg0: i32, %arg1: i32) -> (i32, i32) {
    %c0_i32 = arith.constant 0 : i32
    %c0_i32_0 = arith.constant 0 : i32
    %c0_i32_1 = arith.constant 0 : i32
    return %c0_i32, %c0_i32_0 : i32, i32
  }
  func.func @transform_3(%arg0: i32, %arg1: i32) -> (i32, i32, i32, i32) {
    %c0_i32 = arith.constant 0 : i32
    %c0_i32_0 = arith.constant 0 : i32
    %c0_i32_1 = arith.constant 0 : i32
    return %arg0, %arg1, %c0_i32, %c0_i32_0 : i32, i32, i32, i32
  }
}

module attributes {stable_mosaic.version = 11 : i64} {
  func.func @_conv_stats_kernel(%arg0: i32, %arg1: i32, %arg2: memref<1x1x112x4xbf16, #tpu.memory_space<vmem>>, %arg3: memref<9x4x128xbf16, #tpu.memory_space<vmem>>, %arg4: memref<1x1x2x128xf32, #tpu.memory_space<vmem>>) attributes {dimension_semantics = [#tpu.dimension_semantics<parallel>, #tpu.dimension_semantics<parallel>], iteration_bounds = array<i64: 2, 4>, scalar_prefetch = 0 : i64, scratch_operands = 0 : i64, tpu.core_type = #tpu.core_type<tc>, window_params = [{transform_indices = @transform_0, window_bounds = array<i64: 1, 1, 112, 4>}, {pipeline_mode = #tpu.pipeline_mode<synchronous>, transform_indices = @transform_1, window_bounds = array<i64: 9, 4, 128>}, {transform_indices = @transform_2, window_bounds = array<i64: 1, 1, 2, 128>}]} {
    %c0 = arith.constant 0 : index
    %c0_0 = arith.constant 0 : index
    %c0_1 = arith.constant 0 : index
    %c0_2 = arith.constant 0 : index
    %0 = vector.load %arg2[%c0, %c0_0, %c0_1, %c0_2] : memref<1x1x112x4xbf16, #tpu.memory_space<vmem>>, vector<1x1x112x4xbf16>
    %1 = vector.shape_cast %0 : vector<1x1x112x4xbf16> to vector<112x4xbf16>
    %2 = arith.extf %1 : vector<112x4xbf16> to vector<112x4xf32>
    %cst = arith.constant 0.000000e+00 : f32
    %3 = vector.broadcast %cst : f32 to vector<72x128xf32>
    %4 = vector.extract_strided_slice %2 {offsets = [0, 0], sizes = [72, 4], strides = [1, 1]} : vector<112x4xf32> to vector<72x4xf32>
    %5 = arith.truncf %4 : vector<72x4xf32> to vector<72x4xbf16>
    %c0_3 = arith.constant 0 : index
    %c0_4 = arith.constant 0 : index
    %c0_5 = arith.constant 0 : index
    %6 = vector.load %arg3[%c0_3, %c0_4, %c0_5] : memref<9x4x128xbf16, #tpu.memory_space<vmem>>, vector<1x4x128xbf16>
    %7 = vector.shape_cast %6 : vector<1x4x128xbf16> to vector<4x128xbf16>
    %cst_6 = arith.constant dense<0.000000e+00> : vector<72x128xf32>
    %8 = tpu.matmul %5, %7, %cst_6 {dimension_numbers = #tpu.dot_dimension_numbers<[1], [0], [0], [1], [0, 0, 1, 1], [], []>} : vector<72x4xbf16>, vector<4x128xbf16>, vector<72x128xf32> -> vector<72x128xf32>
    %9 = arith.addf %3, %8 : vector<72x128xf32>
    %10 = vector.extract_strided_slice %2 {offsets = [1, 0], sizes = [72, 4], strides = [1, 1]} : vector<112x4xf32> to vector<72x4xf32>
    %11 = arith.truncf %10 : vector<72x4xf32> to vector<72x4xbf16>
    %c1 = arith.constant 1 : index
    %c0_7 = arith.constant 0 : index
    %c0_8 = arith.constant 0 : index
    %12 = vector.load %arg3[%c1, %c0_7, %c0_8] : memref<9x4x128xbf16, #tpu.memory_space<vmem>>, vector<1x4x128xbf16>
    %13 = vector.shape_cast %12 : vector<1x4x128xbf16> to vector<4x128xbf16>
    %cst_9 = arith.constant dense<0.000000e+00> : vector<72x128xf32>
    %14 = tpu.matmul %11, %13, %cst_9 {dimension_numbers = #tpu.dot_dimension_numbers<[1], [0], [0], [1], [0, 0, 1, 1], [], []>} : vector<72x4xbf16>, vector<4x128xbf16>, vector<72x128xf32> -> vector<72x128xf32>
    %15 = arith.addf %9, %14 : vector<72x128xf32>
    %16 = vector.extract_strided_slice %2 {offsets = [2, 0], sizes = [72, 4], strides = [1, 1]} : vector<112x4xf32> to vector<72x4xf32>
    %17 = arith.truncf %16 : vector<72x4xf32> to vector<72x4xbf16>
    %c2 = arith.constant 2 : index
    %c0_10 = arith.constant 0 : index
    %c0_11 = arith.constant 0 : index
    %18 = vector.load %arg3[%c2, %c0_10, %c0_11] : memref<9x4x128xbf16, #tpu.memory_space<vmem>>, vector<1x4x128xbf16>
    %19 = vector.shape_cast %18 : vector<1x4x128xbf16> to vector<4x128xbf16>
    %cst_12 = arith.constant dense<0.000000e+00> : vector<72x128xf32>
    %20 = tpu.matmul %17, %19, %cst_12 {dimension_numbers = #tpu.dot_dimension_numbers<[1], [0], [0], [1], [0, 0, 1, 1], [], []>} : vector<72x4xbf16>, vector<4x128xbf16>, vector<72x128xf32> -> vector<72x128xf32>
    %21 = arith.addf %15, %20 : vector<72x128xf32>
    %22 = vector.extract_strided_slice %2 {offsets = [18, 0], sizes = [72, 4], strides = [1, 1]} : vector<112x4xf32> to vector<72x4xf32>
    %23 = arith.truncf %22 : vector<72x4xf32> to vector<72x4xbf16>
    %c3 = arith.constant 3 : index
    %c0_13 = arith.constant 0 : index
    %c0_14 = arith.constant 0 : index
    %24 = vector.load %arg3[%c3, %c0_13, %c0_14] : memref<9x4x128xbf16, #tpu.memory_space<vmem>>, vector<1x4x128xbf16>
    %25 = vector.shape_cast %24 : vector<1x4x128xbf16> to vector<4x128xbf16>
    %cst_15 = arith.constant dense<0.000000e+00> : vector<72x128xf32>
    %26 = tpu.matmul %23, %25, %cst_15 {dimension_numbers = #tpu.dot_dimension_numbers<[1], [0], [0], [1], [0, 0, 1, 1], [], []>} : vector<72x4xbf16>, vector<4x128xbf16>, vector<72x128xf32> -> vector<72x128xf32>
    %27 = arith.addf %21, %26 : vector<72x128xf32>
    %28 = vector.extract_strided_slice %2 {offsets = [19, 0], sizes = [72, 4], strides = [1, 1]} : vector<112x4xf32> to vector<72x4xf32>
    %29 = arith.truncf %28 : vector<72x4xf32> to vector<72x4xbf16>
    %c4 = arith.constant 4 : index
    %c0_16 = arith.constant 0 : index
    %c0_17 = arith.constant 0 : index
    %30 = vector.load %arg3[%c4, %c0_16, %c0_17] : memref<9x4x128xbf16, #tpu.memory_space<vmem>>, vector<1x4x128xbf16>
    %31 = vector.shape_cast %30 : vector<1x4x128xbf16> to vector<4x128xbf16>
    %cst_18 = arith.constant dense<0.000000e+00> : vector<72x128xf32>
    %32 = tpu.matmul %29, %31, %cst_18 {dimension_numbers = #tpu.dot_dimension_numbers<[1], [0], [0], [1], [0, 0, 1, 1], [], []>} : vector<72x4xbf16>, vector<4x128xbf16>, vector<72x128xf32> -> vector<72x128xf32>
    %33 = arith.addf %27, %32 : vector<72x128xf32>
    %34 = vector.extract_strided_slice %2 {offsets = [20, 0], sizes = [72, 4], strides = [1, 1]} : vector<112x4xf32> to vector<72x4xf32>
    %35 = arith.truncf %34 : vector<72x4xf32> to vector<72x4xbf16>
    %c5 = arith.constant 5 : index
    %c0_19 = arith.constant 0 : index
    %c0_20 = arith.constant 0 : index
    %36 = vector.load %arg3[%c5, %c0_19, %c0_20] : memref<9x4x128xbf16, #tpu.memory_space<vmem>>, vector<1x4x128xbf16>
    %37 = vector.shape_cast %36 : vector<1x4x128xbf16> to vector<4x128xbf16>
    %cst_21 = arith.constant dense<0.000000e+00> : vector<72x128xf32>
    %38 = tpu.matmul %35, %37, %cst_21 {dimension_numbers = #tpu.dot_dimension_numbers<[1], [0], [0], [1], [0, 0, 1, 1], [], []>} : vector<72x4xbf16>, vector<4x128xbf16>, vector<72x128xf32> -> vector<72x128xf32>
    %39 = arith.addf %33, %38 : vector<72x128xf32>
    %40 = vector.extract_strided_slice %2 {offsets = [36, 0], sizes = [72, 4], strides = [1, 1]} : vector<112x4xf32> to vector<72x4xf32>
    %41 = arith.truncf %40 : vector<72x4xf32> to vector<72x4xbf16>
    %c6 = arith.constant 6 : index
    %c0_22 = arith.constant 0 : index
    %c0_23 = arith.constant 0 : index
    %42 = vector.load %arg3[%c6, %c0_22, %c0_23] : memref<9x4x128xbf16, #tpu.memory_space<vmem>>, vector<1x4x128xbf16>
    %43 = vector.shape_cast %42 : vector<1x4x128xbf16> to vector<4x128xbf16>
    %cst_24 = arith.constant dense<0.000000e+00> : vector<72x128xf32>
    %44 = tpu.matmul %41, %43, %cst_24 {dimension_numbers = #tpu.dot_dimension_numbers<[1], [0], [0], [1], [0, 0, 1, 1], [], []>} : vector<72x4xbf16>, vector<4x128xbf16>, vector<72x128xf32> -> vector<72x128xf32>
    %45 = arith.addf %39, %44 : vector<72x128xf32>
    %46 = vector.extract_strided_slice %2 {offsets = [37, 0], sizes = [72, 4], strides = [1, 1]} : vector<112x4xf32> to vector<72x4xf32>
    %47 = arith.truncf %46 : vector<72x4xf32> to vector<72x4xbf16>
    %c7 = arith.constant 7 : index
    %c0_25 = arith.constant 0 : index
    %c0_26 = arith.constant 0 : index
    %48 = vector.load %arg3[%c7, %c0_25, %c0_26] : memref<9x4x128xbf16, #tpu.memory_space<vmem>>, vector<1x4x128xbf16>
    %49 = vector.shape_cast %48 : vector<1x4x128xbf16> to vector<4x128xbf16>
    %cst_27 = arith.constant dense<0.000000e+00> : vector<72x128xf32>
    %50 = tpu.matmul %47, %49, %cst_27 {dimension_numbers = #tpu.dot_dimension_numbers<[1], [0], [0], [1], [0, 0, 1, 1], [], []>} : vector<72x4xbf16>, vector<4x128xbf16>, vector<72x128xf32> -> vector<72x128xf32>
    %51 = arith.addf %45, %50 : vector<72x128xf32>
    %52 = vector.extract_strided_slice %2 {offsets = [38, 0], sizes = [72, 4], strides = [1, 1]} : vector<112x4xf32> to vector<72x4xf32>
    %53 = arith.truncf %52 : vector<72x4xf32> to vector<72x4xbf16>
    %c8 = arith.constant 8 : index
    %c0_28 = arith.constant 0 : index
    %c0_29 = arith.constant 0 : index
    %54 = vector.load %arg3[%c8, %c0_28, %c0_29] : memref<9x4x128xbf16, #tpu.memory_space<vmem>>, vector<1x4x128xbf16>
    %55 = vector.shape_cast %54 : vector<1x4x128xbf16> to vector<4x128xbf16>
    %cst_30 = arith.constant dense<0.000000e+00> : vector<72x128xf32>
    %56 = tpu.matmul %53, %55, %cst_30 {dimension_numbers = #tpu.dot_dimension_numbers<[1], [0], [0], [1], [0, 0, 1, 1], [], []>} : vector<72x4xbf16>, vector<4x128xbf16>, vector<72x128xf32> -> vector<72x128xf32>
    %57 = arith.addf %51, %56 : vector<72x128xf32>
    %58 = tpu.iota {dimensions = array<i32: 0>} : vector<72x1xi32>
    %c18_i32 = arith.constant 18 : i32
    %c0_i32 = arith.constant 0 : i32
    %59 = arith.cmpi eq, %c18_i32, %c0_i32 : i32
    %c1_i32 = arith.constant 1 : i32
    %60 = arith.select %59, %c1_i32, %c18_i32 : i32
    %61 = vector.broadcast %60 : i32 to vector<72x1xi32>
    %62 = arith.remsi %58, %61 : vector<72x1xi32>
    %c0_i32_31 = arith.constant 0 : i32
    %63 = vector.broadcast %c0_i32_31 : i32 to vector<72x1xi32>
    %64 = arith.cmpi ne, %62, %63 : vector<72x1xi32>
    %c0_i32_32 = arith.constant 0 : i32
    %65 = vector.broadcast %c0_i32_32 : i32 to vector<72x1xi32>
    %66 = arith.cmpi slt, %62, %65 : vector<72x1xi32>
    %c0_i32_33 = arith.constant 0 : i32
    %67 = arith.cmpi slt, %60, %c0_i32_33 : i32
    %68 = vector.broadcast %67 : i1 to vector<72x1xi1>
    %69 = vector.broadcast %68 : vector<72x1xi1> to vector<72x1xi1>
    %70 = arith.xori %66, %69 : vector<72x1xi1>
    %71 = arith.andi %70, %64 : vector<72x1xi1>
    %72 = vector.broadcast %60 : i32 to vector<72x1xi32>
    %73 = arith.addi %62, %72 : vector<72x1xi32>
    %74 = arith.select %71, %73, %62 : vector<72x1xi1>, vector<72x1xi32>
    %c16_i32 = arith.constant 16 : i32
    %75 = vector.broadcast %c16_i32 : i32 to vector<72x1xi32>
    %76 = arith.cmpi slt, %74, %75 : vector<72x1xi32>
    %77 = arith.extui %76 : vector<72x1xi1> to vector<72x1xi32>
    %78 = arith.sitofp %77 : vector<72x1xi32> to vector<72x1xf32>
    %79 = vector.broadcast %78 : vector<72x1xf32> to vector<72x128xf32>
    %80 = arith.mulf %57, %79 : vector<72x128xf32>
    %cst_34 = arith.constant dense<0.000000e+00> : vector<128xf32>
    %81 = vector.multi_reduction <add>, %80, %cst_34 [0] : vector<72x128xf32> to vector<128xf32>
    %82 = vector.shape_cast %81 : vector<128xf32> to vector<1x128xf32>
    %83 = arith.mulf %80, %57 : vector<72x128xf32>
    %cst_35 = arith.constant dense<0.000000e+00> : vector<128xf32>
    %84 = vector.multi_reduction <add>, %83, %cst_35 [0] : vector<72x128xf32> to vector<128xf32>
    %85 = vector.shape_cast %84 : vector<128xf32> to vector<1x128xf32>
    %86 = tpu.concatenate %82, %85 in 0 : vector<1x128xf32>, vector<1x128xf32> -> vector<2x128xf32>
    %c0_36 = arith.constant 0 : index
    %c0_37 = arith.constant 0 : index
    %c0_38 = arith.constant 0 : index
    %c0_39 = arith.constant 0 : index
    %87 = vector.load %arg4[%c0_36, %c0_37, %c0_38, %c0_39] : memref<1x1x2x128xf32, #tpu.memory_space<vmem>>, vector<1x1x2x128xf32>
    %88 = vector.shape_cast %87 : vector<1x1x2x128xf32> to vector<2x128xf32>
    %89 = vector.shape_cast %86 : vector<2x128xf32> to vector<1x1x2x128xf32>
    tpu.vector_store %arg4[%c0_36, %c0_37, %c0_38, %c0_39], %89 {strides = array<i32>} : memref<1x1x2x128xf32, #tpu.memory_space<vmem>>, vector<1x1x2x128xf32>,
    return
  }
  func.func @transform_0(%arg0: i32, %arg1: i32) -> (i32, i32, i32, i32) {
    %c0_i32 = arith.constant 0 : i32
    %c0_i32_0 = arith.constant 0 : i32
    %c0_i32_1 = arith.constant 0 : i32
    return %arg0, %arg1, %c0_i32, %c0_i32_0 : i32, i32, i32, i32
  }
  func.func @transform_1(%arg0: i32, %arg1: i32) -> (i32, i32, i32) {
    %c0_i32 = arith.constant 0 : i32
    %c0_i32_0 = arith.constant 0 : i32
    %c0_i32_1 = arith.constant 0 : i32
    %c0_i32_2 = arith.constant 0 : i32
    return %c0_i32, %c0_i32_0, %c0_i32_1 : i32, i32, i32
  }
  func.func @transform_2(%arg0: i32, %arg1: i32) -> (i32, i32, i32, i32) {
    %c0_i32 = arith.constant 0 : i32
    %c0_i32_0 = arith.constant 0 : i32
    %c0_i32_1 = arith.constant 0 : i32
    return %arg0, %arg1, %c0_i32, %c0_i32_0 : i32, i32, i32, i32
  }
}

</mosaic_0001>

<llo_original>
// kernel: cbr_forward.3
$region0: #{cbr_forward.3}
  #allocation0 [shape = 'u32[]', space=smem, size = 0x4, offset = 0x4, fixed_abs, tag = 'smem constant byte address 0x4 - core index']
  #allocation1 [shape = 'u32[144,128]{1,0:T(1,128)}', space=vmem, size = 0x12000, scoped, tag = 'internal scratch']
  %s0 = inlined_call_operand.vmem [shape: bf16[2,4,112,4], index: 0, kind: input, shape index: {}]
  %s1 = inlined_call_operand.vmem [shape: bf16[9,4,128], index: 1, kind: input, shape index: {}]
  %s2 = inlined_call_operand.vmem [shape: f32[2,128], index: 2, kind: input, shape index: {}]
  %s3 = inlined_call_operand.vmem [shape: f32[2,4,72,8], index: 3, kind: output, shape index: {}]
  %s4 = sld [smem:[#allocation0]]
  $region45: #{cbr_forward.3} parent=0
    _
  %s6 = ssub.s32 1, %s4
  %s7 = scalar_select 0, %s6, %s4
  loop: start=0, step=1, limit=10
  $region2: #{cbr_forward.3} parent=0 // loop_pre_header
    _
  $region3: #{cbr_forward.3} parent=0 // loop_header
    %s9 = sphi 0, %s13
    %p10 = scmp.ge.s32.totalorder %s9, 10
    %s16 = sphi 0, %s28
    %s17 = sphi 0, %s24
    %s18 = sphi 0, %s16
    %s19 = sphi 0, %s17
    %s20 = sphi 0, %s18
    %s21 = sphi 0, %s19
    %s33 = sphi 0, %s35
    %s36 = sphi 0, %s33
    %s37 = sphi 0, %s36
    %s53 = sphi 0, %s37
    %s57 = sphi 0, %s57
    %s59 = sphi 0, %s57
    %s60 = sphi 0, %s59
    %s74 = sphi 0, %s60
    %s78 = sphi 0, %s78
    %s80 = sphi 0, %s78
    %s81 = sphi 0, %s80
    %s95 = sphi 0, %s81
    %s103 = sphi 0, %s105
    %s106 = sphi 0, %s103
    %s107 = sphi 0, %s106
    %s123 = sphi 0, %s107
  $region4: #{cbr_forward.3} parent=0 // loop_header_branch
    %12 = sbr.rel (%p10) target = $region8
  $region5: #{cbr_forward.3} parent=0 // loop_body
    %s14 = ssub.s32 %s9, 1
    %s15 = ssub.s32 %s9, 2
    %s22 = sadd.s32 1, %s17
    %p23 = scmp.ge.s32.totalorder %s22, 4
    %s24 = scalar_select %p23, 0, %s22
    %s25 = sadd.s32 1, %s16
    %s26 = scalar_select %p23, %s25, %s16
    %p27 = scmp.ge.s32.totalorder %s26, 2
    %s28 = scalar_select %p27, 0, %s26
    %s29 = ssub.s32 %s16, %s28
    %s30 = ssub.s32 %s17, %s24
    %s31 = sor.u32 %s29, %s30
    %p32 = scmp.eq.s32.totalorder %s31, 0
    %s34 = sadd.s32 %s33, 1
    %s35 = scalar_select %p32, %s33, %s34
    %p38 = pneg %p32
    %p39 = scmp.eq.s32.totalorder %s9, 7
    %p40 = por %p38, %p39
    %p41 = scmp.ne.s32.totalorder %s33, %s36
    %p42 = scmp.eq.s32.totalorder %s9, 0
    %p43 = por %p41, %p42
    %p44 = scmp.ne.s32.totalorder %s33, %s36
    %p45 = scmp.eq.s32.totalorder %s14, 7
    %p46 = por %p44, %p45
    %p47 = scmp.ne.s32.totalorder %s36, %s37
    %p48 = scmp.eq.s32.totalorder %s14, 0
    %p49 = por %p47, %p48
    %p50 = scmp.ne.s32.totalorder %s36, %s37
    %p51 = scmp.eq.s32.totalorder %s15, 7
    %p52 = por %p50, %p51
    %p54 = scmp.ne.s32.totalorder %s37, %s53
    %p55 = scmp.eq.s32.totalorder %s15, 0
    %p56 = por %p54, %p55
    %s58 = sadd.s32 %s57, 1
    %p61 = scmp.eq.s32.totalorder %s9, 7
    %p62 = scmp.ne.s32.totalorder %s57, %s59
    %p63 = scmp.eq.s32.totalorder %s9, 0
    %p64 = por %p62, %p63
    %p65 = scmp.ne.s32.totalorder %s57, %s59
    %p66 = scmp.eq.s32.totalorder %s14, 7
    %p67 = por %p65, %p66
    %p68 = scmp.ne.s32.totalorder %s59, %s60
    %p69 = scmp.eq.s32.totalorder %s14, 0
    %p70 = por %p68, %p69
    %p71 = scmp.ne.s32.totalorder %s59, %s60
    %p72 = scmp.eq.s32.totalorder %s15, 7
    %p73 = por %p71, %p72
    %p75 = scmp.ne.s32.totalorder %s60, %s74
    %p76 = scmp.eq.s32.totalorder %s15, 0
    %p77 = por %p75, %p76
    %s79 = sadd.s32 %s78, 1
    %p82 = scmp.eq.s32.totalorder %s9, 7
    %p83 = scmp.ne.s32.totalorder %s78, %s80
    %p84 = scmp.eq.s32.totalorder %s9, 0
    %p85 = por %p83, %p84
    %p86 = scmp.ne.s32.totalorder %s78, %s80
    %p87 = scmp.eq.s32.totalorder %s14, 7
    %p88 = por %p86, %p87
    %p89 = scmp.ne.s32.totalorder %s80, %s81
    %p90 = scmp.eq.s32.totalorder %s14, 0
    %p91 = por %p89, %p90
    %p92 = scmp.ne.s32.totalorder %s80, %s81
    %p93 = scmp.eq.s32.totalorder %s15, 7
    %p94 = por %p92, %p93
    %p96 = scmp.ne.s32.totalorder %s81, %s95
    %p97 = scmp.eq.s32.totalorder %s15, 0
    %p98 = por %p96, %p97
    %s99 = ssub.s32 %s16, %s28
    %s100 = ssub.s32 %s17, %s24
    %s101 = sor.u32 %s99, %s100
    %p102 = scmp.eq.s32.totalorder %s101, 0
    %s104 = sadd.s32 %s103, 1
    %s105 = scalar_select %p102, %s103, %s104
    %p108 = pneg %p102
    %p109 = scmp.eq.s32.totalorder %s9, 7
    %p110 = por %p108, %p109
    %p111 = scmp.ne.s32.totalorder %s103, %s106
    %p112 = scmp.eq.s32.totalorder %s9, 0
    %p113 = por %p111, %p112
    %p114 = scmp.ne.s32.totalorder %s103, %s106
    %p115 = scmp.eq.s32.totalorder %s14, 7
    %p116 = por %p114, %p115
    %p117 = scmp.ne.s32.totalorder %s106, %s107
    %p118 = scmp.eq.s32.totalorder %s14, 0
    %p119 = por %p117, %p118
    %p120 = scmp.ne.s32.totalorder %s106, %s107
    %p121 = scmp.eq.s32.totalorder %s15, 7
    %p122 = por %p120, %p121
    %p124 = scmp.ne.s32.totalorder %s107, %s123
    %p125 = scmp.eq.s32.totalorder %s15, 0
    %p126 = por %p124, %p125
    %p127 = scmp.le.s32.totalorder 1, %s9
    %p128 = scmp.lt.s32.totalorder %s9, 9
    %p129 = pnand %p127, %p128
    %p130 = pneg %p129
    // Predicated region
    $region9: #{cbr_forward.3} parent=5 // pred_check
      _
    $region10: #{cbr_forward.3} parent=5 // pred_check_branch
      %132 = sbr.rel (%p129) target = $region12
    $region11: #{cbr_forward.3} parent=5 // pred_region
      %s133 = ssub.s32 %s9, 1
      // Predicated region
      $region13: #{cbr_forward.3} parent=11 // pred_check
        %p134 = pneg %p70
      $region14: #{cbr_forward.3} parent=11 // pred_check_branch
        %136 = sbr.rel (%p134) target = $region16
      $region15: #{cbr_forward.3} parent=11 // pred_region
        _
      $region16: #{cbr_forward.3} parent=11 // pred_fallthru
        _
      // Predicated region
      $region17: #{cbr_forward.3} parent=11 // pred_check
        %p137 = pneg %p91
      $region18: #{cbr_forward.3} parent=11 // pred_check_branch
        %139 = sbr.rel (%p137) target = $region20
      $region19: #{cbr_forward.3} parent=11 // pred_region
        _
      $region20: #{cbr_forward.3} parent=11 // pred_fallthru
        _
    $region12: #{cbr_forward.3} parent=5 // pred_fallthru
      _
    %p140 = scmp.lt.s32.totalorder %s9, 8
    // Predicated region
    $region21: #{cbr_forward.3} parent=5 // pred_check
      %p141 = pneg %p140
    $region22: #{cbr_forward.3} parent=5 // pred_check_branch
      %143 = sbr.rel (%p141) target = $region24
    $region23: #{cbr_forward.3} parent=5 // pred_region
      // Predicated region
      $region25: #{cbr_forward.3} parent=23 // pred_check
        %p144 = pneg %p43
      $region26: #{cbr_forward.3} parent=23 // pred_check_branch
        %146 = sbr.rel (%p144) target = $region28
      $region27: #{cbr_forward.3} parent=23 // pred_region
        %p147 = scmp.lt.s32.totalorder %s16, 1
        %s148 = scalar_select %p147, %s16, 1
        %p149 = scmp.lt.s32.totalorder %s17, 3
        %s150 = scalar_select %p149, %s17, 3
        %s151 = smul.addr %s150, 14
        %s152 = smul.addr %s148, 56
        %s153 = sadd.s32 %s151, %s152
        %s154 = smul.addr %s153, 4
        %s155 = scalar_lea.vmem %s0, %s154
      $region28: #{cbr_forward.3} parent=23 // pred_fallthru
        _
    $region24: #{cbr_forward.3} parent=5 // pred_fallthru
      _
    %p156 = scmp.le.s32.totalorder 1, %s9
    %p157 = scmp.lt.s32.totalorder %s9, 9
    %p158 = pnand %p156, %p157
    %p159 = pneg %p158
    // Predicated region
    $region29: #{cbr_forward.3} parent=5 // pred_check
      _
    $region30: #{cbr_forward.3} parent=5 // pred_check_branch
      %161 = sbr.rel (%p158) target = $region32
    $region31: #{cbr_forward.3} parent=5 // pred_region
      %s162 = ssub.s32 %s9, 1
      %p163 = scmp.lt.s32.totalorder %s18, 1
      %s164 = scalar_select %p163, %s18, 1
      %p165 = scmp.lt.s32.totalorder %s19, 3
      %s166 = scalar_select %p165, %s19, 3
      %s167 = smul.addr %s166, 14
      %s168 = smul.addr %s164, 56
      %s169 = sadd.s32 %s167, %s168
      %s170 = smul.addr %s169, 4
      %s171 = scalar_lea.vmem %s0, %s170
      %p172 = pneg %p49
      %p173 = pneg %p46
      %p174 = pneg %p70
      %p175 = pneg %p67
      %p176 = pneg %p91
      %p177 = pneg %p88
      %p178 = pneg %p119
      %p179 = pneg %p116
      %p180 = scmp.lt.s32.totalorder %s18, 1
      %s181 = scalar_select %p180, %s18, 1
      %p182 = scmp.lt.s32.totalorder %s19, 3
      %s183 = scalar_select %p182, %s19, 3
      %s184 = smul.addr %s183, 9
      %s185 = smul.addr %s181, 36
      %s186 = sadd.s32 %s184, %s185
      %s187 = smul.addr %s186, 8
      %s188 = scalar_lea.vmem %s3, %s187
      %p189 = scmp.lt.s32.totalorder %s18, 1
      %s190 = scalar_select %p189, %s18, 1
      %p191 = scmp.lt.s32.totalorder %s19, 3
      %s192 = scalar_select %p191, %s19, 3
      %s193 = smul.addr %s192, 14
      %s194 = smul.addr %s190, 56
      %s195 = sadd.s32 %s193, %s194
      %s196 = smul.addr %s195, 4
      %s197 = scalar_lea.vmem %s0, %s196
      %p198 = scmp.lt.s32.totalorder %s18, 1
      %s199 = scalar_select %p198, %s18, 1
      %p200 = scmp.lt.s32.totalorder %s19, 3
      %s201 = scalar_select %p200, %s19, 3
      %s202 = smul.addr %s201, 9
      %s203 = smul.addr %s199, 36
      %s204 = sadd.s32 %s202, %s203
      %s205 = smul.addr %s204, 8
      %s206 = scalar_lea.vmem %s3, %s205
      %v208 = vld [vmem:[%s197] sm:$0xf]
      %v209 = vld [vmem:[%s197 + $0x4] sm:$0xf]
      %v210 = vld [vmem:[%s197 + $0x8] sm:$0xf]
      %v211 = vld [vmem:[%s197 + $0xc] sm:$0xf]
      %v212 = vld [vmem:[%s197 + $0x10] sm:$0xf]
      %v213 = vld [vmem:[%s197 + $0x14] sm:$0xf]
      %v214 = vld [vmem:[%s197 + $0x18] sm:$0xf]
      %v215 = vld [vmem:[%s197 + $0x1c] sm:$0xf]
      %v216 = vld [vmem:[%s197 + $0x20] sm:$0xf]
      %v217 = vld [vmem:[%s197 + $0x24] sm:$0xf]
      %v218 = vld [vmem:[%s197 + $0x28] sm:$0xf]
      %v219 = vld [vmem:[%s197 + $0x2c] sm:$0xf]
      %v220 = vld [vmem:[%s197 + $0x30] sm:$0xf]
      %v221 = vld [vmem:[%s197 + $0x34] sm:$0xf]
      %v222 = vunpack.c.l.bf16 %v208
      %v223 = vunpack.c.l.bf16 %v209
      %v224 = vunpack.c.l.bf16 %v210
      %v225 = vunpack.c.l.bf16 %v211
      %v226 = vunpack.c.l.bf16 %v212
      %v227 = vunpack.c.l.bf16 %v213
      %v228 = vunpack.c.l.bf16 %v214
      %v229 = vunpack.c.l.bf16 %v215
      %v230 = vunpack.c.l.bf16 %v216
      %v231 = vunpack.c.l.bf16 %v217
      %v232 = vunpack.c.l.bf16 %v218
      %v233 = vunpack.c.l.bf16 %v219
      %v234 = vunpack.c.l.bf16 %v220
      %v235 = vunpack.c.l.bf16 %v221
      %v236 = vpack.c.bf16 %v223, %v222
      %v237 = vpack.c.bf16 %v225, %v224
      %v238 = vpack.c.bf16 %v227, %v226
      %v239 = vpack.c.bf16 %v229, %v228
      %v240 = vpack.c.bf16 %v230, %v230
      %v241 = vld [vmem:[%s1] sm:$0x3]
      %v242 = vpack.c.bf16 %v231, %v230
      %s243 = scalar_lea.vmem %s1, 2
      %v244 = vld [vmem:[%s243] sm:$0x3]
      %vm245 = vsmask.f32 7424
      %v247 = vshrl.u32 %v236, 16
      %v249 = vshll.u32 %v236, 16
      %v251 = vrot.slane %v249, 1
      %v252 = vor.u32 %v247, %v251
      %v254 = vshll.u32 %v237, 16
      %v256 = vrot.slane %v254, 1
      %v257 = vsel %vm245, %v252, %v256
      %v258 = vshrl.u32 %v237, 16
      %v260 = vor.u32 %v258, %v256
      %v262 = vshll.u32 %v238, 16
      %v264 = vrot.slane %v262, 1
      %v265 = vsel %vm245, %v260, %v264
      %v266 = vshrl.u32 %v238, 16
      %v268 = vor.u32 %v266, %v264
      %v270 = vshll.u32 %v239, 16
      %v272 = vrot.slane %v270, 1
      %v273 = vsel %vm245, %v268, %v272
      %v274 = vshrl.u32 %v239, 16
      %v276 = vor.u32 %v274, %v272
      %v278 = vshll.u32 %v242, 16
      %v280 = vrot.slane %v278, 1
      %v281 = vsel %vm245, %v276, %v280
      %v282 = vshrl.u32 %v242, 16
      %v284 = vor.u32 %v282, %v280
      %vm285 = vcmask 31744
      %v287 = vsel %vm285, %v257, 0
      %v290 = vsel %vm285, %v265, 0
      %v293 = vsel %vm285, %v273, 0
      %v296 = vsel %vm285, %v281, 0
      %v299 = vsel %vm285, %v284, 0
      %vm301 = vcmask 1041408
      %v303 = vsel %vm301, %v244, 0
      %305 = vmatprep.subr.bf16.mxu0 0
      %306 = vmatpush1.bf16.msra.mxu0 0
      %307 = vmatprep.subr.bf16.mxu0 0
      %308 = vmatpush1.bf16.msra.mxu0 0
      %309 = vmatprep.subr.bf16.mxu0 0
      %310 = vmatpush1.bf16.msra.mxu0 0
      %311 = vmatprep.subr.bf16.mxu0 0
      %312 = vmatpush1.bf16.msra.mxu0 0
      %313 = vmatprep.subr.bf16.mxu0 0
      %314 = vmatpush1.bf16.msra.mxu0 0
      %315 = vmatprep.subr.bf16.mxu0 0
      %316 = vmatpush1.bf16.msra.mxu0 0
      %317 = vmatprep.subr.bf16.mxu0 0
      %318 = vmatpush1.bf16.msra.mxu0 0
      %319 = vmatprep.subr.bf16.mxu0 0
      %320 = vmatpush1.bf16.msra.mxu0 %v303
      %321 = vmatprep.subr.bf16.mxu0 0
      %322 = vmatpush2.bf16.msra.mxu0 0
      %323 = vmatprep.subr.bf16.mxu0 0
      %324 = vmatpush2.bf16.msra.mxu0 0
      %325 = vmatprep.subr.bf16.mxu0 0
      %326 = vmatpush2.bf16.msra.mxu0 0
      %327 = vmatprep.subr.bf16.mxu0 0
      %328 = vmatpush2.bf16.msra.mxu0 0
      %329 = vmatprep.subr.bf16.mxu0 0
      %330 = vmatpush2.bf16.msra.mxu0 0
      %331 = vmatprep.subr.bf16.mxu0 0
      %332 = vmatpush2.bf16.msra.mxu0 0
      %333 = vmatprep.subr.bf16.mxu0 0
      %334 = vmatpush2.bf16.msra.mxu0 0
      %335 = vmatprep.subr.bf16.mxu0 0
      %336 = vmatpush2.bf16.msra.mxu0 0
      %337 = vmatprep.mubr.bf16.mxu0 0
      %338 = vmatmul.mubr.bf16.gmra.mxu0 %v287
      %v339 = vpop.f32.mrf.mxu0
      %v340 = vadd.f32 0.0, %v339
      %v341 = vpop.f32.mrf.mxu0
      %v342 = vpop.f32.mrf.mxu0
      %v343 = vadd.f32 0.0, %v342
      %v344 = vpop.f32.mrf.mxu0
      %345 = vmatprep.mubr.bf16.mxu0 0
      %346 = vmatmul.mubr.bf16.gmra.mxu0 %v290
      %v347 = vpop.f32.mrf.mxu0
      %v348 = vadd.f32 0.0, %v347
      %v349 = vpop.f32.mrf.mxu0
      %v350 = vpop.f32.mrf.mxu0
      %v351 = vadd.f32 0.0, %v350
      %v352 = vpop.f32.mrf.mxu0
      %353 = vmatprep.mubr.bf16.mxu0 0
      %354 = vmatmul.mubr.bf16.gmra.mxu0 %v293
      %v355 = vpop.f32.mrf.mxu0
      %v356 = vadd.f32 0.0, %v355
      %v357 = vpop.f32.mrf.mxu0
      %v358 = vpop.f32.mrf.mxu0
      %v359 = vadd.f32 0.0, %v358
      %v360 = vpop.f32.mrf.mxu0
      %361 = vmatprep.mubr.bf16.mxu0 0
      %362 = vmatmul.mubr.bf16.gmra.mxu0 %v296
      %v363 = vpop.f32.mrf.mxu0
      %v364 = vadd.f32 0.0, %v363
      %v365 = vpop.f32.mrf.mxu0
      %v366 = vpop.f32.mrf.mxu0
      %v367 = vadd.f32 0.0, %v366
      %v368 = vpop.f32.mrf.mxu0
      %369 = vmatprep.mubr.bf16.mxu0 0
      %370 = vmatmul.mubr.bf16.gmra.mxu0 %v299
      %v371 = vpop.f32.mrf.mxu0
      %v372 = vadd.f32 0.0, %v371
      %v373 = vpop.f32.mrf.mxu0
      %v374 = vpop.f32.mrf.mxu0
      %v375 = vpop.f32.mrf.mxu0
      %376 = vdwg.mxu0
      %v377 = vsel %vm285, %v236, 0
      %v379 = vsel %vm285, %v237, 0
      %v381 = vsel %vm285, %v238, 0
      %v383 = vsel %vm285, %v239, 0
      %v386 = vsel %vm285, %v240, 0
      %v389 = vsel %vm301, %v241, 0
      %391 = vmatprep.subr.bf16.mxu0 0
      %392 = vmatpush1.bf16.msra.mxu0 0
      %393 = vmatprep.subr.bf16.mxu0 0
      %394 = vmatpush1.bf16.msra.mxu0 0
      %395 = vmatprep.subr.bf16.mxu0 0
      %396 = vmatpush1.bf16.msra.mxu0 0
      %397 = vmatprep.subr.bf16.mxu0 0
      %398 = vmatpush1.bf16.msra.mxu0 0
      %399 = vmatprep.subr.bf16.mxu0 0
      %400 = vmatpush1.bf16.msra.mxu0 0
      %401 = vmatprep.subr.bf16.mxu0 0
      %402 = vmatpush1.bf16.msra.mxu0 0
      %403 = vmatprep.subr.bf16.mxu0 0
      %404 = vmatpush1.bf16.msra.mxu0 0
      %405 = vmatprep.subr.bf16.mxu0 0
      %406 = vmatpush1.bf16.msra.mxu0 %v389
      %407 = vmatprep.subr.bf16.mxu0 0
      %408 = vmatpush2.bf16.msra.mxu0 0
      %409 = vmatprep.subr.bf16.mxu0 0
      %410 = vmatpush2.bf16.msra.mxu0 0
      %411 = vmatprep.subr.bf16.mxu0 0
      %412 = vmatpush2.bf16.msra.mxu0 0
      %413 = vmatprep.subr.bf16.mxu0 0
      %414 = vmatpush2.bf16.msra.mxu0 0
      %415 = vmatprep.subr.bf16.mxu0 0
      %416 = vmatpush2.bf16.msra.mxu0 0
      %417 = vmatprep.subr.bf16.mxu0 0
      %418 = vmatpush2.bf16.msra.mxu0 0
      %419 = vmatprep.subr.bf16.mxu0 0
      %420 = vmatpush2.bf16.msra.mxu0 0
      %421 = vmatprep.subr.bf16.mxu0 0
      %422 = vmatpush2.bf16.msra.mxu0 0
      %423 = vmatprep.mubr.bf16.mxu0 0
      %424 = vmatmul.mubr.bf16.gmra.mxu0 %v377
      %v425 = vpop.f32.mrf.mxu0
      %v426 = vadd.f32 %v340, %v425
      %v427 = vpop.f32.mrf.mxu0
      %v428 = vpop.f32.mrf.mxu0
      %v429 = vadd.f32 %v343, %v428
      %v430 = vpop.f32.mrf.mxu0
      %431 = vmatprep.mubr.bf16.mxu0 0
      %432 = vmatmul.mubr.bf16.gmra.mxu0 %v379
      %v433 = vpop.f32.mrf.mxu0
      %v434 = vadd.f32 %v348, %v433
      %v435 = vpop.f32.mrf.mxu0
      %v436 = vpop.f32.mrf.mxu0
      %v437 = vadd.f32 %v351, %v436
      %v438 = vpop.f32.mrf.mxu0
      %439 = vmatprep.mubr.bf16.mxu0 0
      %440 = vmatmul.mubr.bf16.gmra.mxu0 %v381
      %v441 = vpop.f32.mrf.mxu0
      %v442 = vadd.f32 %v356, %v441
      %v443 = vpop.f32.mrf.mxu0
      %v444 = vpop.f32.mrf.mxu0
      %v445 = vadd.f32 %v359, %v444
      %v446 = vpop.f32.mrf.mxu0
      %447 = vmatprep.mubr.bf16.mxu0 0
      %448 = vmatmul.mubr.bf16.gmra.mxu0 %v383
      %v449 = vpop.f32.mrf.mxu0
      %v450 = vadd.f32 %v364, %v449
      %v451 = vpop.f32.mrf.mxu0
      %v452 = vpop.f32.mrf.mxu0
      %v453 = vadd.f32 %v367, %v452
      %v454 = vpop.f32.mrf.mxu0
      %455 = vmatprep.mubr.bf16.mxu0 0
      %456 = vmatmul.mubr.bf16.gmra.mxu0 %v386
      %v457 = vpop.f32.mrf.mxu0
      %v458 = vadd.f32 %v372, %v457
      %v459 = vpop.f32.mrf.mxu0
      %v460 = vpop.f32.mrf.mxu0
      %v461 = vpop.f32.mrf.mxu0
      %462 = vdwg.mxu0
      %s463 = scalar_lea.vmem %s1, 4
      %v464 = vld [vmem:[%s463] sm:$0x3]
      %vm470 = vcmask 1046528
      %v471 = vrot.slane %v236, 1
      %v472 = vrot.slane %v237, 1
      %v473 = vsel %vm470, %v471, %v472
      %v474 = vrot.slane %v238, 1
      %v475 = vsel %vm470, %v472, %v474
      %v476 = vrot.slane %v239, 1
      %v477 = vsel %vm470, %v474, %v476
      %v478 = vrot.slane %v242, 1
      %v479 = vsel %vm470, %v476, %v478
      %v481 = vsel %vm285, %v473, 0
      %v484 = vsel %vm285, %v475, 0
      %v487 = vsel %vm285, %v477, 0
      %v490 = vsel %vm285, %v479, 0
      %v493 = vsel %vm285, %v478, 0
      %v496 = vsel %vm301, %v464, 0
      %498 = vmatprep.subr.bf16.mxu0 0
      %499 = vmatpush1.bf16.msra.mxu0 0
      %500 = vmatprep.subr.bf16.mxu0 0
      %501 = vmatpush1.bf16.msra.mxu0 0
      %502 = vmatprep.subr.bf16.mxu0 0
      %503 = vmatpush1.bf16.msra.mxu0 0
      %504 = vmatprep.subr.bf16.mxu0 0
      %505 = vmatpush1.bf16.msra.mxu0 0
      %506 = vmatprep.subr.bf16.mxu0 0
      %507 = vmatpush1.bf16.msra.mxu0 0
      %508 = vmatprep.subr.bf16.mxu0 0
      %509 = vmatpush1.bf16.msra.mxu0 0
      %510 = vmatprep.subr.bf16.mxu0 0
      %511 = vmatpush1.bf16.msra.mxu0 0
      %512 = vmatprep.subr.bf16.mxu0 0
      %513 = vmatpush1.bf16.msra.mxu0 %v496
      %514 = vmatprep.subr.bf16.mxu0 0
      %515 = vmatpush2.bf16.msra.mxu0 0
      %516 = vmatprep.subr.bf16.mxu0 0
      %517 = vmatpush2.bf16.msra.mxu0 0
      %518 = vmatprep.subr.bf16.mxu0 0
      %519 = vmatpush2.bf16.msra.mxu0 0
      %520 = vmatprep.subr.bf16.mxu0 0
      %521 = vmatpush2.bf16.msra.mxu0 0
      %522 = vmatprep.subr.bf16.mxu0 0
      %523 = vmatpush2.bf16.msra.mxu0 0
      %524 = vmatprep.subr.bf16.mxu0 0
      %525 = vmatpush2.bf16.msra.mxu0 0
      %526 = vmatprep.subr.bf16.mxu0 0
      %527 = vmatpush2.bf16.msra.mxu0 0
      %528 = vmatprep.subr.bf16.mxu0 0
      %529 = vmatpush2.bf16.msra.mxu0 0
      %530 = vmatprep.mubr.bf16.mxu0 0
      %531 = vmatmul.mubr.bf16.gmra.mxu0 %v481
      %v532 = vpop.f32.mrf.mxu0
      %v533 = vadd.f32 0.0, %v532
      %v534 = vpop.f32.mrf.mxu0
      %v535 = vpop.f32.mrf.mxu0
      %v536 = vadd.f32 0.0, %v535
      %v537 = vpop.f32.mrf.mxu0
      %538 = vmatprep.mubr.bf16.mxu0 0
      %539 = vmatmul.mubr.bf16.gmra.mxu0 %v484
      %v540 = vpop.f32.mrf.mxu0
      %v541 = vadd.f32 0.0, %v540
      %v542 = vpop.f32.mrf.mxu0
      %v543 = vpop.f32.mrf.mxu0
      %v544 = vadd.f32 0.0, %v543
      %v545 = vpop.f32.mrf.mxu0
      %546 = vmatprep.mubr.bf16.mxu0 0
      %547 = vmatmul.mubr.bf16.gmra.mxu0 %v487
      %v548 = vpop.f32.mrf.mxu0
      %v549 = vadd.f32 0.0, %v548
      %v550 = vpop.f32.mrf.mxu0
      %v551 = vpop.f32.mrf.mxu0
      %v552 = vadd.f32 0.0, %v551
      %v553 = vpop.f32.mrf.mxu0
      %554 = vmatprep.mubr.bf16.mxu0 0
      %555 = vmatmul.mubr.bf16.gmra.mxu0 %v490
      %v556 = vpop.f32.mrf.mxu0
      %v557 = vadd.f32 0.0, %v556
      %v558 = vpop.f32.mrf.mxu0
      %v559 = vpop.f32.mrf.mxu0
      %v560 = vadd.f32 0.0, %v559
      %v561 = vpop.f32.mrf.mxu0
      %562 = vmatprep.mubr.bf16.mxu0 0
      %563 = vmatmul.mubr.bf16.gmra.mxu0 %v493
      %v564 = vpop.f32.mrf.mxu0
      %v565 = vadd.f32 0.0, %v564
      %v566 = vpop.f32.mrf.mxu0
      %v567 = vpop.f32.mrf.mxu0
      %v568 = vpop.f32.mrf.mxu0
      %569 = vdwg.mxu0
      %v570 = vadd.f32 %v426, %v533
      %v571 = vadd.f32 %v429, %v536
      %v572 = vadd.f32 %v434, %v541
      %v573 = vadd.f32 %v437, %v544
      %v574 = vadd.f32 %v442, %v549
      %v575 = vadd.f32 %v445, %v552
      %v576 = vadd.f32 %v450, %v557
      %v577 = vadd.f32 %v453, %v560
      %v578 = vadd.f32 %v458, %v565
      %v579 = vpack.c.bf16 %v233, %v232
      %s580 = scalar_lea.vmem %s1, 6
      %v581 = vld [vmem:[%s580] sm:$0x3]
      %v583 = vrot.slane %v579, 1
      %v584 = vsel %vm470, %v478, %v583
      %v586 = vsel %vm285, %v584, 0
      %v589 = vsel %vm285, %v583, 0
      %v592 = vsel %vm301, %v581, 0
      %594 = vmatprep.subr.bf16.mxu0 0
      %595 = vmatpush1.bf16.msra.mxu0 0
      %596 = vmatprep.subr.bf16.mxu0 0
      %597 = vmatpush1.bf16.msra.mxu0 0
      %598 = vmatprep.subr.bf16.mxu0 0
      %599 = vmatpush1.bf16.msra.mxu0 0
      %600 = vmatprep.subr.bf16.mxu0 0
      %601 = vmatpush1.bf16.msra.mxu0 0
      %602 = vmatprep.subr.bf16.mxu0 0
      %603 = vmatpush1.bf16.msra.mxu0 0
      %604 = vmatprep.subr.bf16.mxu0 0
      %605 = vmatpush1.bf16.msra.mxu0 0
      %606 = vmatprep.subr.bf16.mxu0 0
      %607 = vmatpush1.bf16.msra.mxu0 0
      %608 = vmatprep.subr.bf16.mxu0 0
      %609 = vmatpush1.bf16.msra.mxu0 %v592
      %610 = vmatprep.subr.bf16.mxu0 0
      %611 = vmatpush2.bf16.msra.mxu0 0
      %612 = vmatprep.subr.bf16.mxu0 0
      %613 = vmatpush2.bf16.msra.mxu0 0
      %614 = vmatprep.subr.bf16.mxu0 0
      %615 = vmatpush2.bf16.msra.mxu0 0
      %616 = vmatprep.subr.bf16.mxu0 0
      %617 = vmatpush2.bf16.msra.mxu0 0
      %618 = vmatprep.subr.bf16.mxu0 0
      %619 = vmatpush2.bf16.msra.mxu0 0
      %620 = vmatprep.subr.bf16.mxu0 0
      %621 = vmatpush2.bf16.msra.mxu0 0
      %622 = vmatprep.subr.bf16.mxu0 0
      %623 = vmatpush2.bf16.msra.mxu0 0
      %624 = vmatprep.subr.bf16.mxu0 0
      %625 = vmatpush2.bf16.msra.mxu0 0
      %626 = vmatprep.mubr.bf16.mxu0 0
      %627 = vmatmul.mubr.bf16.gmra.mxu0 %v484
      %v628 = vpop.f32.mrf.mxu0
      %v629 = vadd.f32 0.0, %v628
      %v630 = vpop.f32.mrf.mxu0
      %v631 = vpop.f32.mrf.mxu0
      %v632 = vadd.f32 0.0, %v631
      %v633 = vpop.f32.mrf.mxu0
      %634 = vmatprep.mubr.bf16.mxu0 0
      %635 = vmatmul.mubr.bf16.gmra.mxu0 %v487
      %v636 = vpop.f32.mrf.mxu0
      %v637 = vadd.f32 0.0, %v636
      %v638 = vpop.f32.mrf.mxu0
      %v639 = vpop.f32.mrf.mxu0
      %v640 = vadd.f32 0.0, %v639
      %v641 = vpop.f32.mrf.mxu0
      %642 = vmatprep.mubr.bf16.mxu0 0
      %643 = vmatmul.mubr.bf16.gmra.mxu0 %v490
      %v644 = vpop.f32.mrf.mxu0
      %v645 = vadd.f32 0.0, %v644
      %v646 = vpop.f32.mrf.mxu0
      %v647 = vpop.f32.mrf.mxu0
      %v648 = vadd.f32 0.0, %v647
      %v649 = vpop.f32.mrf.mxu0
      %650 = vmatprep.mubr.bf16.mxu0 0
      %651 = vmatmul.mubr.bf16.gmra.mxu0 %v586
      %v652 = vpop.f32.mrf.mxu0
      %v653 = vadd.f32 0.0, %v652
      %v654 = vpop.f32.mrf.mxu0
      %v655 = vpop.f32.mrf.mxu0
      %v656 = vadd.f32 0.0, %v655
      %v657 = vpop.f32.mrf.mxu0
      %658 = vmatprep.mubr.bf16.mxu0 0
      %659 = vmatmul.mubr.bf16.gmra.mxu0 %v589
      %v660 = vpop.f32.mrf.mxu0
      %v661 = vadd.f32 0.0, %v660
      %v662 = vpop.f32.mrf.mxu0
      %v663 = vpop.f32.mrf.mxu0
      %v664 = vpop.f32.mrf.mxu0
      %665 = vdwg.mxu0
      %v666 = vadd.f32 %v570, %v629
      %v667 = vadd.f32 %v571, %v632
      %v668 = vadd.f32 %v572, %v637
      %v669 = vadd.f32 %v573, %v640
      %v670 = vadd.f32 %v574, %v645
      %v671 = vadd.f32 %v575, %v648
      %v672 = vadd.f32 %v576, %v653
      %v673 = vadd.f32 %v577, %v656
      %v674 = vadd.f32 %v578, %v661
      %s675 = scalar_lea.vmem %s1, 8
      %v676 = vld [vmem:[%s675] sm:$0x3]
      %vm677 = vsmask.f32 6400
      %v678 = vrot.slane %v258, 1
      %v679 = vrot.slane %v254, 2
      %v680 = vor.u32 %v678, %v679
      %v681 = vrot.slane %v266, 1
      %v682 = vrot.slane %v262, 2
      %v683 = vor.u32 %v681, %v682
      %v684 = vsel %vm677, %v680, %v683
      %v685 = vrot.slane %v274, 1
      %v686 = vrot.slane %v270, 2
      %v687 = vor.u32 %v685, %v686
      %v688 = vsel %vm677, %v683, %v687
      %v689 = vrot.slane %v282, 1
      %v690 = vrot.slane %v278, 2
      %v691 = vor.u32 %v689, %v690
      %v692 = vsel %vm677, %v687, %v691
      %v694 = vshrl.u32 %v579, 16
      %v696 = vrot.slane %v694, 1
      %v697 = vshll.u32 %v579, 16
      %v699 = vrot.slane %v697, 2
      %v700 = vor.u32 %v696, %v699
      %v701 = vsel %vm677, %v691, %v700
      %v703 = vsel %vm285, %v684, 0
      %v706 = vsel %vm285, %v688, 0
      %v709 = vsel %vm285, %v692, 0
      %v712 = vsel %vm285, %v701, 0
      %v715 = vsel %vm285, %v700, 0
      %v718 = vsel %vm301, %v676, 0
      %720 = vmatprep.subr.bf16.mxu0 0
      %721 = vmatpush1.bf16.msra.mxu0 0
      %722 = vmatprep.subr.bf16.mxu0 0
      %723 = vmatpush1.bf16.msra.mxu0 0
      %724 = vmatprep.subr.bf16.mxu0 0
      %725 = vmatpush1.bf16.msra.mxu0 0
      %726 = vmatprep.subr.bf16.mxu0 0
      %727 = vmatpush1.bf16.msra.mxu0 0
      %728 = vmatprep.subr.bf16.mxu0 0
      %729 = vmatpush1.bf16.msra.mxu0 0
      %730 = vmatprep.subr.bf16.mxu0 0
      %731 = vmatpush1.bf16.msra.mxu0 0
      %732 = vmatprep.subr.bf16.mxu0 0
      %733 = vmatpush1.bf16.msra.mxu0 0
      %734 = vmatprep.subr.bf16.mxu0 0
      %735 = vmatpush1.bf16.msra.mxu0 %v718
      %736 = vmatprep.subr.bf16.mxu0 0
      %737 = vmatpush2.bf16.msra.mxu0 0
      %738 = vmatprep.subr.bf16.mxu0 0
      %739 = vmatpush2.bf16.msra.mxu0 0
      %740 = vmatprep.subr.bf16.mxu0 0
      %741 = vmatpush2.bf16.msra.mxu0 0
      %742 = vmatprep.subr.bf16.mxu0 0
      %743 = vmatpush2.bf16.msra.mxu0 0
      %744 = vmatprep.subr.bf16.mxu0 0
      %745 = vmatpush2.bf16.msra.mxu0 0
      %746 = vmatprep.subr.bf16.mxu0 0
      %747 = vmatpush2.bf16.msra.mxu0 0
      %748 = vmatprep.subr.bf16.mxu0 0
      %749 = vmatpush2.bf16.msra.mxu0 0
      %750 = vmatprep.subr.bf16.mxu0 0
      %751 = vmatpush2.bf16.msra.mxu0 0
      %752 = vmatprep.mubr.bf16.mxu0 0
      %753 = vmatmul.mubr.bf16.gmra.mxu0 %v703
      %v754 = vpop.f32.mrf.mxu0
      %v755 = vadd.f32 0.0, %v754
      %v756 = vpop.f32.mrf.mxu0
      %v757 = vpop.f32.mrf.mxu0
      %v758 = vadd.f32 0.0, %v757
      %v759 = vpop.f32.mrf.mxu0
      %760 = vmatprep.mubr.bf16.mxu0 0
      %761 = vmatmul.mubr.bf16.gmra.mxu0 %v706
      %v762 = vpop.f32.mrf.mxu0
      %v763 = vadd.f32 0.0, %v762
      %v764 = vpop.f32.mrf.mxu0
      %v765 = vpop.f32.mrf.mxu0
      %v766 = vadd.f32 0.0, %v765
      %v767 = vpop.f32.mrf.mxu0
      %768 = vmatprep.mubr.bf16.mxu0 0
      %769 = vmatmul.mubr.bf16.gmra.mxu0 %v709
      %v770 = vpop.f32.mrf.mxu0
      %v771 = vadd.f32 0.0, %v770
      %v772 = vpop.f32.mrf.mxu0
      %v773 = vpop.f32.mrf.mxu0
      %v774 = vadd.f32 0.0, %v773
      %v775 = vpop.f32.mrf.mxu0
      %776 = vmatprep.mubr.bf16.mxu0 0
      %777 = vmatmul.mubr.bf16.gmra.mxu0 %v712
      %v778 = vpop.f32.mrf.mxu0
      %v779 = vadd.f32 0.0, %v778
      %v780 = vpop.f32.mrf.mxu0
      %v781 = vpop.f32.mrf.mxu0
      %v782 = vadd.f32 0.0, %v781
      %v783 = vpop.f32.mrf.mxu0
      %784 = vmatprep.mubr.bf16.mxu0 0
      %785 = vmatmul.mubr.bf16.gmra.mxu0 %v715
      %v786 = vpop.f32.mrf.mxu0
      %v787 = vadd.f32 0.0, %v786
      %v788 = vpop.f32.mrf.mxu0
      %v789 = vpop.f32.mrf.mxu0
      %v790 = vpop.f32.mrf.mxu0
      %791 = vdwg.mxu0
      %v792 = vadd.f32 %v666, %v755
      %v793 = vadd.f32 %v667, %v758
      %v794 = vadd.f32 %v668, %v763
      %v795 = vadd.f32 %v669, %v766
      %v796 = vadd.f32 %v670, %v771
      %v797 = vadd.f32 %v671, %v774
      %v798 = vadd.f32 %v672, %v779
      %v799 = vadd.f32 %v673, %v782
      %v800 = vadd.f32 %v674, %v787
      %s801 = scalar_lea.vmem %s1, 10
      %v802 = vld [vmem:[%s801] sm:$0x3]
      %vm803 = vcmask 1045504
      %v804 = vrot.slane %v237, 2
      %v805 = vrot.slane %v238, 2
      %v806 = vsel %vm803, %v804, %v805
      %v807 = vrot.slane %v239, 2
      %v808 = vsel %vm803, %v805, %v807
      %v809 = vrot.slane %v242, 2
      %v810 = vsel %vm803, %v807, %v809
      %v811 = vrot.slane %v579, 2
      %v812 = vsel %vm803, %v809, %v811
      %v814 = vsel %vm285, %v806, 0
      %v817 = vsel %vm285, %v808, 0
      %v820 = vsel %vm285, %v810, 0
      %v823 = vsel %vm285, %v812, 0
      %v826 = vsel %vm285, %v811, 0
      %v829 = vsel %vm301, %v802, 0
      %831 = vmatprep.subr.bf16.mxu0 0
      %832 = vmatpush1.bf16.msra.mxu0 0
      %833 = vmatprep.subr.bf16.mxu0 0
      %834 = vmatpush1.bf16.msra.mxu0 0
      %835 = vmatprep.subr.bf16.mxu0 0
      %836 = vmatpush1.bf16.msra.mxu0 0
      %837 = vmatprep.subr.bf16.mxu0 0
      %838 = vmatpush1.bf16.msra.mxu0 0
      %839 = vmatprep.subr.bf16.mxu0 0
      %840 = vmatpush1.bf16.msra.mxu0 0
      %841 = vmatprep.subr.bf16.mxu0 0
      %842 = vmatpush1.bf16.msra.mxu0 0
      %843 = vmatprep.subr.bf16.mxu0 0
      %844 = vmatpush1.bf16.msra.mxu0 0
      %845 = vmatprep.subr.bf16.mxu0 0
      %846 = vmatpush1.bf16.msra.mxu0 %v829
      %847 = vmatprep.subr.bf16.mxu0 0
      %848 = vmatpush2.bf16.msra.mxu0 0
      %849 = vmatprep.subr.bf16.mxu0 0
      %850 = vmatpush2.bf16.msra.mxu0 0
      %851 = vmatprep.subr.bf16.mxu0 0
      %852 = vmatpush2.bf16.msra.mxu0 0
      %853 = vmatprep.subr.bf16.mxu0 0
      %854 = vmatpush2.bf16.msra.mxu0 0
      %855 = vmatprep.subr.bf16.mxu0 0
      %856 = vmatpush2.bf16.msra.mxu0 0
      %857 = vmatprep.subr.bf16.mxu0 0
      %858 = vmatpush2.bf16.msra.mxu0 0
      %859 = vmatprep.subr.bf16.mxu0 0
      %860 = vmatpush2.bf16.msra.mxu0 0
      %861 = vmatprep.subr.bf16.mxu0 0
      %862 = vmatpush2.bf16.msra.mxu0 0
      %863 = vmatprep.mubr.bf16.mxu0 0
      %864 = vmatmul.mubr.bf16.gmra.mxu0 %v814
      %v865 = vpop.f32.mrf.mxu0
      %v866 = vadd.f32 0.0, %v865
      %v867 = vpop.f32.mrf.mxu0
      %v868 = vpop.f32.mrf.mxu0
      %v869 = vadd.f32 0.0, %v868
      %v870 = vpop.f32.mrf.mxu0
      %871 = vmatprep.mubr.bf16.mxu0 0
      %872 = vmatmul.mubr.bf16.gmra.mxu0 %v817
      %v873 = vpop.f32.mrf.mxu0
      %v874 = vadd.f32 0.0, %v873
      %v875 = vpop.f32.mrf.mxu0
      %v876 = vpop.f32.mrf.mxu0
      %v877 = vadd.f32 0.0, %v876
      %v878 = vpop.f32.mrf.mxu0
      %879 = vmatprep.mubr.bf16.mxu0 0
      %880 = vmatmul.mubr.bf16.gmra.mxu0 %v820
      %v881 = vpop.f32.mrf.mxu0
      %v882 = vadd.f32 0.0, %v881
      %v883 = vpop.f32.mrf.mxu0
      %v884 = vpop.f32.mrf.mxu0
      %v885 = vadd.f32 0.0, %v884
      %v886 = vpop.f32.mrf.mxu0
      %887 = vmatprep.mubr.bf16.mxu0 0
      %888 = vmatmul.mubr.bf16.gmra.mxu0 %v823
      %v889 = vpop.f32.mrf.mxu0
      %v890 = vadd.f32 0.0, %v889
      %v891 = vpop.f32.mrf.mxu0
      %v892 = vpop.f32.mrf.mxu0
      %v893 = vadd.f32 0.0, %v892
      %v894 = vpop.f32.mrf.mxu0
      %895 = vmatprep.mubr.bf16.mxu0 0
      %896 = vmatmul.mubr.bf16.gmra.mxu0 %v826
      %v897 = vpop.f32.mrf.mxu0
      %v898 = vadd.f32 0.0, %v897
      %v899 = vpop.f32.mrf.mxu0
      %v900 = vpop.f32.mrf.mxu0
      %v901 = vpop.f32.mrf.mxu0
      %902 = vdwg.mxu0
      %v903 = vadd.f32 %v792, %v866
      %v904 = vadd.f32 %v793, %v869
      %v905 = vadd.f32 %v794, %v874
      %v906 = vadd.f32 %v795, %v877
      %v907 = vadd.f32 %v796, %v882
      %v908 = vadd.f32 %v797, %v885
      %v909 = vadd.f32 %v798, %v890
      %v910 = vadd.f32 %v799, %v893
      %v911 = vadd.f32 %v800, %v898
      %v912 = vpack.c.bf16 %v235, %v234
      %s913 = scalar_lea.vmem %s1, 12
      %v914 = vld [vmem:[%s913] sm:$0x3]
      %v916 = vrot.slane %v912, 2
      %v917 = vsel %vm803, %v811, %v916
      %v919 = vsel %vm285, %v917, 0
      %v922 = vsel %vm285, %v916, 0
      %v925 = vsel %vm301, %v914, 0
      %927 = vmatprep.subr.bf16.mxu0 0
      %928 = vmatpush1.bf16.msra.mxu0 0
      %929 = vmatprep.subr.bf16.mxu0 0
      %930 = vmatpush1.bf16.msra.mxu0 0
      %931 = vmatprep.subr.bf16.mxu0 0
      %932 = vmatpush1.bf16.msra.mxu0 0
      %933 = vmatprep.subr.bf16.mxu0 0
      %934 = vmatpush1.bf16.msra.mxu0 0
      %935 = vmatprep.subr.bf16.mxu0 0
      %936 = vmatpush1.bf16.msra.mxu0 0
      %937 = vmatprep.subr.bf16.mxu0 0
      %938 = vmatpush1.bf16.msra.mxu0 0
      %939 = vmatprep.subr.bf16.mxu0 0
      %940 = vmatpush1.bf16.msra.mxu0 0
      %941 = vmatprep.subr.bf16.mxu0 0
      %942 = vmatpush1.bf16.msra.mxu0 %v925
      %943 = vmatprep.subr.bf16.mxu0 0
      %944 = vmatpush2.bf16.msra.mxu0 0
      %945 = vmatprep.subr.bf16.mxu0 0
      %946 = vmatpush2.bf16.msra.mxu0 0
      %947 = vmatprep.subr.bf16.mxu0 0
      %948 = vmatpush2.bf16.msra.mxu0 0
      %949 = vmatprep.subr.bf16.mxu0 0
      %950 = vmatpush2.bf16.msra.mxu0 0
      %951 = vmatprep.subr.bf16.mxu0 0
      %952 = vmatpush2.bf16.msra.mxu0 0
      %953 = vmatprep.subr.bf16.mxu0 0
      %954 = vmatpush2.bf16.msra.mxu0 0
      %955 = vmatprep.subr.bf16.mxu0 0
      %956 = vmatpush2.bf16.msra.mxu0 0
      %957 = vmatprep.subr.bf16.mxu0 0
      %958 = vmatpush2.bf16.msra.mxu0 0
      %959 = vmatprep.mubr.bf16.mxu0 0
      %960 = vmatmul.mubr.bf16.gmra.mxu0 %v817
      %v961 = vpop.f32.mrf.mxu0
      %v962 = vadd.f32 0.0, %v961
      %v963 = vpop.f32.mrf.mxu0
      %v964 = vpop.f32.mrf.mxu0
      %v965 = vadd.f32 0.0, %v964
      %v966 = vpop.f32.mrf.mxu0
      %967 = vmatprep.mubr.bf16.mxu0 0
      %968 = vmatmul.mubr.bf16.gmra.mxu0 %v820
      %v969 = vpop.f32.mrf.mxu0
      %v970 = vadd.f32 0.0, %v969
      %v971 = vpop.f32.mrf.mxu0
      %v972 = vpop.f32.mrf.mxu0
      %v973 = vadd.f32 0.0, %v972
      %v974 = vpop.f32.mrf.mxu0
      %975 = vmatprep.mubr.bf16.mxu0 0
      %976 = vmatmul.mubr.bf16.gmra.mxu0 %v823
      %v977 = vpop.f32.mrf.mxu0
      %v978 = vadd.f32 0.0, %v977
      %v979 = vpop.f32.mrf.mxu0
      %v980 = vpop.f32.mrf.mxu0
      %v981 = vadd.f32 0.0, %v980
      %v982 = vpop.f32.mrf.mxu0
      %983 = vmatprep.mubr.bf16.mxu0 0
      %984 = vmatmul.mubr.bf16.gmra.mxu0 %v919
      %v985 = vpop.f32.mrf.mxu0
      %v986 = vadd.f32 0.0, %v985
      %v987 = vpop.f32.mrf.mxu0
      %v988 = vpop.f32.mrf.mxu0
      %v989 = vadd.f32 0.0, %v988
      %v990 = vpop.f32.mrf.mxu0
      %991 = vmatprep.mubr.bf16.mxu0 0
      %992 = vmatmul.mubr.bf16.gmra.mxu0 %v922
      %v993 = vpop.f32.mrf.mxu0
      %v994 = vadd.f32 0.0, %v993
      %v995 = vpop.f32.mrf.mxu0
      %v996 = vpop.f32.mrf.mxu0
      %v997 = vpop.f32.mrf.mxu0
      %998 = vdwg.mxu0
      %v999 = vadd.f32 %v903, %v962
      %v1000 = vadd.f32 %v904, %v965
      %v1001 = vadd.f32 %v905, %v970
      %v1002 = vadd.f32 %v906, %v973
      %v1003 = vadd.f32 %v907, %v978
      %v1004 = vadd.f32 %v908, %v981
      %v1005 = vadd.f32 %v909, %v986
      %v1006 = vadd.f32 %v910, %v989
      %v1007 = vadd.f32 %v911, %v994
      %s1008 = scalar_lea.vmem %s1, 14
      %v1009 = vld [vmem:[%s1008] sm:$0x3]
      %vm1010 = vsmask.f32 5376
      %v1011 = vrot.slane %v266, 2
      %v1012 = vrot.slane %v262, 3
      %v1013 = vor.u32 %v1011, %v1012
      %v1014 = vrot.slane %v274, 2
      %v1015 = vrot.slane %v270, 3
      %v1016 = vor.u32 %v1014, %v1015
      %v1017 = vsel %vm1010, %v1013, %v1016
      %v1018 = vrot.slane %v282, 2
      %v1019 = vrot.slane %v278, 3
      %v1020 = vor.u32 %v1018, %v1019
      %v1021 = vsel %vm1010, %v1016, %v1020
      %v1022 = vrot.slane %v694, 2
      %v1023 = vrot.slane %v697, 3
      %v1024 = vor.u32 %v1022, %v1023
      %v1025 = vsel %vm1010, %v1020, %v1024
      %v1027 = vshrl.u32 %v912, 16
      %v1029 = vrot.slane %v1027, 2
      %v1030 = vshll.u32 %v912, 16
      %v1032 = vrot.slane %v1030, 3
      %v1033 = vor.u32 %v1029, %v1032
      %v1034 = vsel %vm1010, %v1024, %v1033
      %v1036 = vsel %vm285, %v1017, 0
      %v1039 = vsel %vm285, %v1021, 0
      %v1042 = vsel %vm285, %v1025, 0
      %v1045 = vsel %vm285, %v1034, 0
      %v1048 = vsel %vm285, %v1033, 0
      %v1051 = vsel %vm301, %v1009, 0
      %1053 = vmatprep.subr.bf16.mxu0 0
      %1054 = vmatpush1.bf16.msra.mxu0 0
      %1055 = vmatprep.subr.bf16.mxu0 0
      %1056 = vmatpush1.bf16.msra.mxu0 0
      %1057 = vmatprep.subr.bf16.mxu0 0
      %1058 = vmatpush1.bf16.msra.mxu0 0
      %1059 = vmatprep.subr.bf16.mxu0 0
      %1060 = vmatpush1.bf16.msra.mxu0 0
      %1061 = vmatprep.subr.bf16.mxu0 0
      %1062 = vmatpush1.bf16.msra.mxu0 0
      %1063 = vmatprep.subr.bf16.mxu0 0
      %1064 = vmatpush1.bf16.msra.mxu0 0
      %1065 = vmatprep.subr.bf16.mxu0 0
      %1066 = vmatpush1.bf16.msra.mxu0 0
      %1067 = vmatprep.subr.bf16.mxu0 0
      %1068 = vmatpush1.bf16.msra.mxu0 %v1051
      %1069 = vmatprep.subr.bf16.mxu0 0
      %1070 = vmatpush2.bf16.msra.mxu0 0
      %1071 = vmatprep.subr.bf16.mxu0 0
      %1072 = vmatpush2.bf16.msra.mxu0 0
      %1073 = vmatprep.subr.bf16.mxu0 0
      %1074 = vmatpush2.bf16.msra.mxu0 0
      %1075 = vmatprep.subr.bf16.mxu0 0
      %1076 = vmatpush2.bf16.msra.mxu0 0
      %1077 = vmatprep.subr.bf16.mxu0 0
      %1078 = vmatpush2.bf16.msra.mxu0 0
      %1079 = vmatprep.subr.bf16.mxu0 0
      %1080 = vmatpush2.bf16.msra.mxu0 0
      %1081 = vmatprep.subr.bf16.mxu0 0
      %1082 = vmatpush2.bf16.msra.mxu0 0
      %1083 = vmatprep.subr.bf16.mxu0 0
      %1084 = vmatpush2.bf16.msra.mxu0 0
      %1085 = vmatprep.mubr.bf16.mxu0 0
      %1086 = vmatmul.mubr.bf16.gmra.mxu0 %v1036
      %v1087 = vpop.f32.mrf.mxu0
      %v1088 = vadd.f32 0.0, %v1087
      %v1089 = vpop.f32.mrf.mxu0
      %v1090 = vpop.f32.mrf.mxu0
      %v1091 = vadd.f32 0.0, %v1090
      %v1092 = vpop.f32.mrf.mxu0
      %1093 = vmatprep.mubr.bf16.mxu0 0
      %1094 = vmatmul.mubr.bf16.gmra.mxu0 %v1039
      %v1095 = vpop.f32.mrf.mxu0
      %v1096 = vadd.f32 0.0, %v1095
      %v1097 = vpop.f32.mrf.mxu0
      %v1098 = vpop.f32.mrf.mxu0
      %v1099 = vadd.f32 0.0, %v1098
      %v1100 = vpop.f32.mrf.mxu0
      %1101 = vmatprep.mubr.bf16.mxu0 0
      %1102 = vmatmul.mubr.bf16.gmra.mxu0 %v1042
      %v1103 = vpop.f32.mrf.mxu0
      %v1104 = vadd.f32 0.0, %v1103
      %v1105 = vpop.f32.mrf.mxu0
      %v1106 = vpop.f32.mrf.mxu0
      %v1107 = vadd.f32 0.0, %v1106
      %v1108 = vpop.f32.mrf.mxu0
      %1109 = vmatprep.mubr.bf16.mxu0 0
      %1110 = vmatmul.mubr.bf16.gmra.mxu0 %v1045
      %v1111 = vpop.f32.mrf.mxu0
      %v1112 = vadd.f32 0.0, %v1111
      %v1113 = vpop.f32.mrf.mxu0
      %v1114 = vpop.f32.mrf.mxu0
      %v1115 = vadd.f32 0.0, %v1114
      %v1116 = vpop.f32.mrf.mxu0
      %1117 = vmatprep.mubr.bf16.mxu0 0
      %1118 = vmatmul.mubr.bf16.gmra.mxu0 %v1048
      %v1119 = vpop.f32.mrf.mxu0
      %v1120 = vadd.f32 0.0, %v1119
      %v1121 = vpop.f32.mrf.mxu0
      %v1122 = vpop.f32.mrf.mxu0
      %v1123 = vpop.f32.mrf.mxu0
      %1124 = vdwg.mxu0
      %v1125 = vadd.f32 %v999, %v1088
      %v1126 = vadd.f32 %v1000, %v1091
      %v1127 = vadd.f32 %v1001, %v1096
      %v1128 = vadd.f32 %v1002, %v1099
      %v1129 = vadd.f32 %v1003, %v1104
      %v1130 = vadd.f32 %v1004, %v1107
      %v1131 = vadd.f32 %v1005, %v1112
      %v1132 = vadd.f32 %v1006, %v1115
      %v1133 = vadd.f32 %v1007, %v1120
      %s1134 = scalar_lea.vmem %s1, 16
      %v1135 = vld [vmem:[%s1134] sm:$0x3]
      %vm1136 = vcmask 1044480
      %v1137 = vrot.slane %v238, 3
      %v1138 = vrot.slane %v239, 3
      %v1139 = vsel %vm1136, %v1137, %v1138
      %v1140 = vrot.slane %v242, 3
      %v1141 = vsel %vm1136, %v1138, %v1140
      %v1142 = vrot.slane %v579, 3
      %v1143 = vsel %vm1136, %v1140, %v1142
      %v1144 = vrot.slane %v912, 3
      %v1145 = vsel %vm1136, %v1142, %v1144
      %v1147 = vsel %vm285, %v1139, 0
      %v1150 = vsel %vm285, %v1141, 0
      %v1153 = vsel %vm285, %v1143, 0
      %v1156 = vsel %vm285, %v1145, 0
      %v1159 = vsel %vm285, %v1144, 0
      %v1162 = vsel %vm301, %v1135, 0
      %1164 = vmatprep.subr.bf16.mxu0 0
      %1165 = vmatpush1.bf16.msra.mxu0 0
      %1166 = vmatprep.subr.bf16.mxu0 0
      %1167 = vmatpush1.bf16.msra.mxu0 0
      %1168 = vmatprep.subr.bf16.mxu0 0
      %1169 = vmatpush1.bf16.msra.mxu0 0
      %1170 = vmatprep.subr.bf16.mxu0 0
      %1171 = vmatpush1.bf16.msra.mxu0 0
      %1172 = vmatprep.subr.bf16.mxu0 0
      %1173 = vmatpush1.bf16.msra.mxu0 0
      %1174 = vmatprep.subr.bf16.mxu0 0
      %1175 = vmatpush1.bf16.msra.mxu0 0
      %1176 = vmatprep.subr.bf16.mxu0 0
      %1177 = vmatpush1.bf16.msra.mxu0 0
      %1178 = vmatprep.subr.bf16.mxu0 0
      %1179 = vmatpush1.bf16.msra.mxu0 %v1162
      %1180 = vmatprep.subr.bf16.mxu0 0
      %1181 = vmatpush2.bf16.msra.mxu0 0
      %1182 = vmatprep.subr.bf16.mxu0 0
      %1183 = vmatpush2.bf16.msra.mxu0 0
      %1184 = vmatprep.subr.bf16.mxu0 0
      %1185 = vmatpush2.bf16.msra.mxu0 0
      %1186 = vmatprep.subr.bf16.mxu0 0
      %1187 = vmatpush2.bf16.msra.mxu0 0
      %1188 = vmatprep.subr.bf16.mxu0 0
      %1189 = vmatpush2.bf16.msra.mxu0 0
      %1190 = vmatprep.subr.bf16.mxu0 0
      %1191 = vmatpush2.bf16.msra.mxu0 0
      %1192 = vmatprep.subr.bf16.mxu0 0
      %1193 = vmatpush2.bf16.msra.mxu0 0
      %1194 = vmatprep.subr.bf16.mxu0 0
      %1195 = vmatpush2.bf16.msra.mxu0 0
      %1196 = vmatprep.mubr.bf16.mxu0 0
      %1197 = vmatmul.mubr.bf16.gmra.mxu0 %v1147
      %v1198 = vpop.f32.mrf.mxu0
      %v1199 = vadd.f32 0.0, %v1198
      %v1200 = vpop.f32.mrf.mxu0
      %v1201 = vpop.f32.mrf.mxu0
      %v1202 = vadd.f32 0.0, %v1201
      %v1203 = vpop.f32.mrf.mxu0
      %1204 = vmatprep.mubr.bf16.mxu0 0
      %1205 = vmatmul.mubr.bf16.gmra.mxu0 %v1150
      %v1206 = vpop.f32.mrf.mxu0
      %v1207 = vadd.f32 0.0, %v1206
      %v1208 = vpop.f32.mrf.mxu0
      %v1209 = vpop.f32.mrf.mxu0
      %v1210 = vadd.f32 0.0, %v1209
      %v1211 = vpop.f32.mrf.mxu0
      %1212 = vmatprep.mubr.bf16.mxu0 0
      %1213 = vmatmul.mubr.bf16.gmra.mxu0 %v1153
      %v1214 = vpop.f32.mrf.mxu0
      %v1215 = vadd.f32 0.0, %v1214
      %v1216 = vpop.f32.mrf.mxu0
      %v1217 = vpop.f32.mrf.mxu0
      %v1218 = vadd.f32 0.0, %v1217
      %v1219 = vpop.f32.mrf.mxu0
      %1220 = vmatprep.mubr.bf16.mxu0 0
      %1221 = vmatmul.mubr.bf16.gmra.mxu0 %v1156
      %v1222 = vpop.f32.mrf.mxu0
      %v1223 = vadd.f32 0.0, %v1222
      %v1224 = vpop.f32.mrf.mxu0
      %v1225 = vpop.f32.mrf.mxu0
      %v1226 = vadd.f32 0.0, %v1225
      %v1227 = vpop.f32.mrf.mxu0
      %1228 = vmatprep.mubr.bf16.mxu0 0
      %1229 = vmatmul.mubr.bf16.gmra.mxu0 %v1159
      %v1230 = vpop.f32.mrf.mxu0
      %v1231 = vadd.f32 0.0, %v1230
      %v1232 = vpop.f32.mrf.mxu0
      %v1233 = vpop.f32.mrf.mxu0
      %v1234 = vpop.f32.mrf.mxu0
      %1235 = vdwg.mxu0
      %v1236 = vadd.f32 %v1125, %v1199
      %v1237 = vadd.f32 %v1126, %v1202
      %v1238 = vadd.f32 %v1127, %v1207
      %v1239 = vadd.f32 %v1128, %v1210
      %v1240 = vadd.f32 %v1129, %v1215
      %v1241 = vadd.f32 %v1130, %v1218
      %v1242 = vadd.f32 %v1131, %v1223
      %v1243 = vadd.f32 %v1132, %v1226
      %v1244 = vadd.f32 %v1133, %v1231
      %v1245 = vld [vmem:[%s2] sm:$0x1]
      %v1246 = vld [vmem:[%s2 + $0x1] sm:$0x1]
      %v1247 = vlaneseq
      %v1248 = vshrl.u32 %v1247, 7
      %v1249 = vsub.s32 0, %v1248
      %v1250 = vrot.slane %v1245, %v1249
      %v1251 = vmul.f32 %v1236, %v1250
      %v1252 = vmul.f32 %v1237, %v1250
      %v1253 = vmul.f32 %v1238, %v1250
      %v1254 = vmul.f32 %v1239, %v1250
      %v1255 = vmul.f32 %v1240, %v1250
      %v1256 = vmul.f32 %v1241, %v1250
      %v1257 = vmul.f32 %v1242, %v1250
      %v1258 = vmul.f32 %v1243, %v1250
      %v1259 = vmul.f32 %v1244, %v1250
      %v1260 = vlaneseq
      %v1261 = vshrl.u32 %v1260, 7
      %v1262 = vsub.s32 0, %v1261
      %v1263 = vrot.slane %v1246, %v1262
      %v1264 = vadd.f32 %v1251, %v1263
      %v1265 = vadd.f32 %v1252, %v1263
      %v1266 = vadd.f32 %v1253, %v1263
      %v1267 = vadd.f32 %v1254, %v1263
      %v1268 = vadd.f32 %v1255, %v1263
      %v1269 = vadd.f32 %v1256, %v1263
      %v1270 = vadd.f32 %v1257, %v1263
      %v1271 = vadd.f32 %v1258, %v1263
      %v1272 = vadd.f32 %v1259, %v1263
      %v1273 = vmax.f32 %v1264, 0.0
      %v1274 = vmax.f32 %v1265, 0.0
      %v1275 = vmax.f32 %v1266, 0.0
      %v1276 = vmax.f32 %v1267, 0.0
      %v1277 = vmax.f32 %v1268, 0.0
      %v1278 = vmax.f32 %v1269, 0.0
      %v1279 = vmax.f32 %v1270, 0.0
      %v1280 = vmax.f32 %v1271, 0.0
      %v1281 = vmax.f32 %v1272, 0.0
      %vm1282 = vcmask 64512
      %1283 = vst.msk [vmem:[%s206] sm:$0xff] %vm1282, %v1273
      %1284 = vst.msk [vmem:[%s206 + $0x8] sm:$0xff] %vm1282, %v1274
      %1285 = vst.msk [vmem:[%s206 + $0x10] sm:$0xff] %vm1282, %v1275
      %1286 = vst.msk [vmem:[%s206 + $0x18] sm:$0xff] %vm1282, %v1276
      %1287 = vst.msk [vmem:[%s206 + $0x20] sm:$0xff] %vm1282, %v1277
      %1288 = vst.msk [vmem:[%s206 + $0x28] sm:$0xff] %vm1282, %v1278
      %1289 = vst.msk [vmem:[%s206 + $0x30] sm:$0xff] %vm1282, %v1279
      %1290 = vst.msk [vmem:[%s206 + $0x38] sm:$0xff] %vm1282, %v1280
      %1291 = vst.msk [vmem:[%s206 + $0x40] sm:$0xff] %vm1282, %v1281
      %p1292 = scmp.lt.s32.totalorder %s18, 1
      %s1293 = scalar_select %p1292, %s18, 1
      %p1294 = scmp.lt.s32.totalorder %s19, 3
      %s1295 = scalar_select %p1294, %s19, 3
      %s1296 = smul.addr %s1295, 9
      %s1297 = smul.addr %s1293, 36
      %s1298 = sadd.s32 %s1296, %s1297
      %s1299 = smul.addr %s1298, 8
      %s1300 = scalar_lea.vmem %s3, %s1299
      // Predicated region
      $region33: #{cbr_forward.3} parent=31 // pred_check
        %p1301 = pneg %p116
      $region34: #{cbr_forward.3} parent=31 // pred_check_branch
        %1303 = sbr.rel (%p1301) target = $region36
      $region35: #{cbr_forward.3} parent=31 // pred_region
        _
      $region36: #{cbr_forward.3} parent=31 // pred_fallthru
        _
    $region32: #{cbr_forward.3} parent=5 // pred_fallthru
      _
    %p1304 = scmp.le.s32.totalorder 2, %s9
    // Predicated region
    $region37: #{cbr_forward.3} parent=5 // pred_check
      %p1305 = pneg %p1304
    $region38: #{cbr_forward.3} parent=5 // pred_check_branch
      %1307 = sbr.rel (%p1305) target = $region40
    $region39: #{cbr_forward.3} parent=5 // pred_region
      %s1308 = ssub.s32 %s9, 2
      // Predicated region
      $region41: #{cbr_forward.3} parent=39 // pred_check
        %p1309 = pneg %p122
      $region42: #{cbr_forward.3} parent=39 // pred_check_branch
        %1311 = sbr.rel (%p1309) target = $region44
      $region43: #{cbr_forward.3} parent=39 // pred_region
        %p1312 = scmp.lt.s32.totalorder %s20, 1
        %s1313 = scalar_select %p1312, %s20, 1
        %p1314 = scmp.lt.s32.totalorder %s21, 3
        %s1315 = scalar_select %p1314, %s21, 3
        %s1316 = smul.addr %s1315, 9
        %s1317 = smul.addr %s1313, 36
        %s1318 = sadd.s32 %s1316, %s1317
        %s1319 = smul.addr %s1318, 8
        %s1320 = scalar_lea.vmem %s3, %s1319
      $region44: #{cbr_forward.3} parent=39 // pred_fallthru
        _
    $region40: #{cbr_forward.3} parent=5 // pred_fallthru
      _
  $region6: #{cbr_forward.3} parent=0 // loop_footer
    %s13 = sadd.s32 1, %s9
  $region7: #{cbr_forward.3} parent=0 // loop_footer_branch
    %8 = sbr.rel target = $region3
  $region8: #{cbr_forward.3} parent=0 // loop_exit
    _

// kernel: cbr_forward.2
$region0: #{cbr_forward.2}
  #allocation0 [shape = 'u32[]', space=smem, size = 0x4, offset = 0x4, fixed_abs, tag = 'smem constant byte address 0x4 - core index']
  #allocation1 [shape = 'u32[144,128]{1,0:T(1,128)}', space=vmem, size = 0x12000, scoped, tag = 'internal scratch']
  %s0 = inlined_call_operand.vmem [shape: bf16[2,4,112,4], index: 0, kind: input, shape index: {}]
  %s1 = inlined_call_operand.vmem [shape: bf16[9,4,128], index: 1, kind: input, shape index: {}]
  %s2 = inlined_call_operand.vmem [shape: f32[2,4,2,128], index: 2, kind: output, shape index: {}]
  %s3 = sld [smem:[#allocation0]]
  $region41: #{cbr_forward.2} parent=0
    _
  %s5 = ssub.s32 1, %s3
  %s6 = scalar_select 0, %s5, %s3
  loop: start=0, step=1, limit=10
  $region2: #{cbr_forward.2} parent=0 // loop_pre_header
    _
  $region3: #{cbr_forward.2} parent=0 // loop_header
    %s8 = sphi 0, %s12
    %p9 = scmp.ge.s32.totalorder %s8, 10
    %s15 = sphi 0, %s27
    %s16 = sphi 0, %s23
    %s17 = sphi 0, %s15
    %s18 = sphi 0, %s16
    %s19 = sphi 0, %s17
    %s20 = sphi 0, %s18
    %s32 = sphi 0, %s34
    %s35 = sphi 0, %s32
    %s36 = sphi 0, %s35
    %s52 = sphi 0, %s36
    %s56 = sphi 0, %s56
    %s58 = sphi 0, %s56
    %s59 = sphi 0, %s58
    %s73 = sphi 0, %s59
    %s81 = sphi 0, %s83
    %s84 = sphi 0, %s81
    %s85 = sphi 0, %s84
    %s101 = sphi 0, %s85
  $region4: #{cbr_forward.2} parent=0 // loop_header_branch
    %11 = sbr.rel (%p9) target = $region8
  $region5: #{cbr_forward.2} parent=0 // loop_body
    %s13 = ssub.s32 %s8, 1
    %s14 = ssub.s32 %s8, 2
    %s21 = sadd.s32 1, %s16
    %p22 = scmp.ge.s32.totalorder %s21, 4
    %s23 = scalar_select %p22, 0, %s21
    %s24 = sadd.s32 1, %s15
    %s25 = scalar_select %p22, %s24, %s15
    %p26 = scmp.ge.s32.totalorder %s25, 2
    %s27 = scalar_select %p26, 0, %s25
    %s28 = ssub.s32 %s15, %s27
    %s29 = ssub.s32 %s16, %s23
    %s30 = sor.u32 %s28, %s29
    %p31 = scmp.eq.s32.totalorder %s30, 0
    %s33 = sadd.s32 %s32, 1
    %s34 = scalar_select %p31, %s32, %s33
    %p37 = pneg %p31
    %p38 = scmp.eq.s32.totalorder %s8, 7
    %p39 = por %p37, %p38
    %p40 = scmp.ne.s32.totalorder %s32, %s35
    %p41 = scmp.eq.s32.totalorder %s8, 0
    %p42 = por %p40, %p41
    %p43 = scmp.ne.s32.totalorder %s32, %s35
    %p44 = scmp.eq.s32.totalorder %s13, 7
    %p45 = por %p43, %p44
    %p46 = scmp.ne.s32.totalorder %s35, %s36
    %p47 = scmp.eq.s32.totalorder %s13, 0
    %p48 = por %p46, %p47
    %p49 = scmp.ne.s32.totalorder %s35, %s36
    %p50 = scmp.eq.s32.totalorder %s14, 7
    %p51 = por %p49, %p50
    %p53 = scmp.ne.s32.totalorder %s36, %s52
    %p54 = scmp.eq.s32.totalorder %s14, 0
    %p55 = por %p53, %p54
    %s57 = sadd.s32 %s56, 1
    %p60 = scmp.eq.s32.totalorder %s8, 7
    %p61 = scmp.ne.s32.totalorder %s56, %s58
    %p62 = scmp.eq.s32.totalorder %s8, 0
    %p63 = por %p61, %p62
    %p64 = scmp.ne.s32.totalorder %s56, %s58
    %p65 = scmp.eq.s32.totalorder %s13, 7
    %p66 = por %p64, %p65
    %p67 = scmp.ne.s32.totalorder %s58, %s59
    %p68 = scmp.eq.s32.totalorder %s13, 0
    %p69 = por %p67, %p68
    %p70 = scmp.ne.s32.totalorder %s58, %s59
    %p71 = scmp.eq.s32.totalorder %s14, 7
    %p72 = por %p70, %p71
    %p74 = scmp.ne.s32.totalorder %s59, %s73
    %p75 = scmp.eq.s32.totalorder %s14, 0
    %p76 = por %p74, %p75
    %s77 = ssub.s32 %s15, %s27
    %s78 = ssub.s32 %s16, %s23
    %s79 = sor.u32 %s77, %s78
    %p80 = scmp.eq.s32.totalorder %s79, 0
    %s82 = sadd.s32 %s81, 1
    %s83 = scalar_select %p80, %s81, %s82
    %p86 = pneg %p80
    %p87 = scmp.eq.s32.totalorder %s8, 7
    %p88 = por %p86, %p87
    %p89 = scmp.ne.s32.totalorder %s81, %s84
    %p90 = scmp.eq.s32.totalorder %s8, 0
    %p91 = por %p89, %p90
    %p92 = scmp.ne.s32.totalorder %s81, %s84
    %p93 = scmp.eq.s32.totalorder %s13, 7
    %p94 = por %p92, %p93
    %p95 = scmp.ne.s32.totalorder %s84, %s85
    %p96 = scmp.eq.s32.totalorder %s13, 0
    %p97 = por %p95, %p96
    %p98 = scmp.ne.s32.totalorder %s84, %s85
    %p99 = scmp.eq.s32.totalorder %s14, 7
    %p100 = por %p98, %p99
    %p102 = scmp.ne.s32.totalorder %s85, %s101
    %p103 = scmp.eq.s32.totalorder %s14, 0
    %p104 = por %p102, %p103
    %p105 = scmp.le.s32.totalorder 1, %s8
    %p106 = scmp.lt.s32.totalorder %s8, 9
    %p107 = pnand %p105, %p106
    %p108 = pneg %p107
    // Predicated region
    $region9: #{cbr_forward.2} parent=5 // pred_check
      _
    $region10: #{cbr_forward.2} parent=5 // pred_check_branch
      %110 = sbr.rel (%p107) target = $region12
    $region11: #{cbr_forward.2} parent=5 // pred_region
      %s111 = ssub.s32 %s8, 1
      // Predicated region
      $region13: #{cbr_forward.2} parent=11 // pred_check
        %p112 = pneg %p69
      $region14: #{cbr_forward.2} parent=11 // pred_check_branch
        %114 = sbr.rel (%p112) target = $region16
      $region15: #{cbr_forward.2} parent=11 // pred_region
        _
      $region16: #{cbr_forward.2} parent=11 // pred_fallthru
        _
    $region12: #{cbr_forward.2} parent=5 // pred_fallthru
      _
    %p115 = scmp.lt.s32.totalorder %s8, 8
    // Predicated region
    $region17: #{cbr_forward.2} parent=5 // pred_check
      %p116 = pneg %p115
    $region18: #{cbr_forward.2} parent=5 // pred_check_branch
      %118 = sbr.rel (%p116) target = $region20
    $region19: #{cbr_forward.2} parent=5 // pred_region
      // Predicated region
      $region21: #{cbr_forward.2} parent=19 // pred_check
        %p119 = pneg %p42
      $region22: #{cbr_forward.2} parent=19 // pred_check_branch
        %121 = sbr.rel (%p119) target = $region24
      $region23: #{cbr_forward.2} parent=19 // pred_region
        %p122 = scmp.lt.s32.totalorder %s15, 1
        %s123 = scalar_select %p122, %s15, 1
        %p124 = scmp.lt.s32.totalorder %s16, 3
        %s125 = scalar_select %p124, %s16, 3
        %s126 = smul.addr %s125, 14
        %s127 = smul.addr %s123, 56
        %s128 = sadd.s32 %s126, %s127
        %s129 = smul.addr %s128, 4
        %s130 = scalar_lea.vmem %s0, %s129
      $region24: #{cbr_forward.2} parent=19 // pred_fallthru
        _
    $region20: #{cbr_forward.2} parent=5 // pred_fallthru
      _
    %p131 = scmp.le.s32.totalorder 1, %s8
    %p132 = scmp.lt.s32.totalorder %s8, 9
    %p133 = pnand %p131, %p132
    %p134 = pneg %p133
    // Predicated region
    $region25: #{cbr_forward.2} parent=5 // pred_check
      _
    $region26: #{cbr_forward.2} parent=5 // pred_check_branch
      %136 = sbr.rel (%p133) target = $region28
    $region27: #{cbr_forward.2} parent=5 // pred_region
      %s137 = ssub.s32 %s8, 1
      %p138 = scmp.lt.s32.totalorder %s17, 1
      %s139 = scalar_select %p138, %s17, 1
      %p140 = scmp.lt.s32.totalorder %s18, 3
      %s141 = scalar_select %p140, %s18, 3
      %s142 = smul.addr %s141, 14
      %s143 = smul.addr %s139, 56
      %s144 = sadd.s32 %s142, %s143
      %s145 = smul.addr %s144, 4
      %s146 = scalar_lea.vmem %s0, %s145
      %p147 = pneg %p48
      %p148 = pneg %p45
      %p149 = pneg %p69
      %p150 = pneg %p66
      %p151 = pneg %p97
      %p152 = pneg %p94
      %p153 = scmp.lt.s32.totalorder %s17, 1
      %s154 = scalar_select %p153, %s17, 1
      %p155 = scmp.lt.s32.totalorder %s18, 3
      %s156 = scalar_select %p155, %s18, 3
      %s157 = smul.addr %s154, 4
      %s158 = sadd.s32 %s156, %s157
      %s159 = smul.addr %s158, 2
      %s160 = scalar_lea.vmem %s2, %s159
      %p161 = scmp.lt.s32.totalorder %s17, 1
      %s162 = scalar_select %p161, %s17, 1
      %p163 = scmp.lt.s32.totalorder %s18, 3
      %s164 = scalar_select %p163, %s18, 3
      %s165 = smul.addr %s164, 14
      %s166 = smul.addr %s162, 56
      %s167 = sadd.s32 %s165, %s166
      %s168 = smul.addr %s167, 4
      %s169 = scalar_lea.vmem %s0, %s168
      %p170 = scmp.lt.s32.totalorder %s17, 1
      %s171 = scalar_select %p170, %s17, 1
      %p172 = scmp.lt.s32.totalorder %s18, 3
      %s173 = scalar_select %p172, %s18, 3
      %s174 = smul.addr %s171, 4
      %s175 = sadd.s32 %s173, %s174
      %s176 = smul.addr %s175, 2
      %s177 = scalar_lea.vmem %s2, %s176
      %v179 = vld [vmem:[%s169] sm:$0xf]
      %v180 = vld [vmem:[%s169 + $0x4] sm:$0xf]
      %v181 = vld [vmem:[%s169 + $0x8] sm:$0xf]
      %v182 = vld [vmem:[%s169 + $0xc] sm:$0xf]
      %v183 = vld [vmem:[%s169 + $0x10] sm:$0xf]
      %v184 = vld [vmem:[%s169 + $0x14] sm:$0xf]
      %v185 = vld [vmem:[%s169 + $0x18] sm:$0xf]
      %v186 = vld [vmem:[%s169 + $0x1c] sm:$0xf]
      %v187 = vld [vmem:[%s169 + $0x20] sm:$0xf]
      %v188 = vld [vmem:[%s169 + $0x24] sm:$0xf]
      %v189 = vld [vmem:[%s169 + $0x28] sm:$0xf]
      %v190 = vld [vmem:[%s169 + $0x2c] sm:$0xf]
      %v191 = vld [vmem:[%s169 + $0x30] sm:$0xf]
      %v192 = vld [vmem:[%s169 + $0x34] sm:$0xf]
      %v193 = vunpack.c.l.bf16 %v179
      %v194 = vunpack.c.l.bf16 %v180
      %v195 = vunpack.c.l.bf16 %v181
      %v196 = vunpack.c.l.bf16 %v182
      %v197 = vunpack.c.l.bf16 %v183
      %v198 = vunpack.c.l.bf16 %v184
      %v199 = vunpack.c.l.bf16 %v185
      %v200 = vunpack.c.l.bf16 %v186
      %v201 = vunpack.c.l.bf16 %v187
      %v202 = vunpack.c.l.bf16 %v188
      %v203 = vunpack.c.l.bf16 %v189
      %v204 = vunpack.c.l.bf16 %v190
      %v205 = vunpack.c.l.bf16 %v191
      %v206 = vunpack.c.l.bf16 %v192
      %v207 = vpack.c.bf16 %v194, %v193
      %v208 = vpack.c.bf16 %v196, %v195
      %v209 = vpack.c.bf16 %v198, %v197
      %v210 = vpack.c.bf16 %v200, %v199
      %v211 = vpack.c.bf16 %v201, %v201
      %v212 = vld [vmem:[%s1] sm:$0x3]
      %v213 = vpack.c.bf16 %v202, %v201
      %s214 = scalar_lea.vmem %s1, 2
      %v215 = vld [vmem:[%s214] sm:$0x3]
      %vm216 = vsmask.f32 7424
      %v218 = vshrl.u32 %v207, 16
      %v220 = vshll.u32 %v207, 16
      %v222 = vrot.slane %v220, 1
      %v223 = vor.u32 %v218, %v222
      %v225 = vshll.u32 %v208, 16
      %v227 = vrot.slane %v225, 1
      %v228 = vsel %vm216, %v223, %v227
      %v229 = vshrl.u32 %v208, 16
      %v231 = vor.u32 %v229, %v227
      %v233 = vshll.u32 %v209, 16
      %v235 = vrot.slane %v233, 1
      %v236 = vsel %vm216, %v231, %v235
      %v237 = vshrl.u32 %v209, 16
      %v239 = vor.u32 %v237, %v235
      %v241 = vshll.u32 %v210, 16
      %v243 = vrot.slane %v241, 1
      %v244 = vsel %vm216, %v239, %v243
      %v245 = vshrl.u32 %v210, 16
      %v247 = vor.u32 %v245, %v243
      %v249 = vshll.u32 %v213, 16
      %v251 = vrot.slane %v249, 1
      %v252 = vsel %vm216, %v247, %v251
      %v253 = vshrl.u32 %v213, 16
      %v255 = vor.u32 %v253, %v251
      %vm256 = vcmask 31744
      %v258 = vsel %vm256, %v228, 0
      %v261 = vsel %vm256, %v236, 0
      %v264 = vsel %vm256, %v244, 0
      %v267 = vsel %vm256, %v252, 0
      %v270 = vsel %vm256, %v255, 0
      %vm272 = vcmask 1041408
      %v274 = vsel %vm272, %v215, 0
      %276 = vmatprep.subr.bf16.mxu0 0
      %277 = vmatpush1.bf16.msra.mxu0 0
      %278 = vmatprep.subr.bf16.mxu0 0
      %279 = vmatpush1.bf16.msra.mxu0 0
      %280 = vmatprep.subr.bf16.mxu0 0
      %281 = vmatpush1.bf16.msra.mxu0 0
      %282 = vmatprep.subr.bf16.mxu0 0
      %283 = vmatpush1.bf16.msra.mxu0 0
      %284 = vmatprep.subr.bf16.mxu0 0
      %285 = vmatpush1.bf16.msra.mxu0 0
      %286 = vmatprep.subr.bf16.mxu0 0
      %287 = vmatpush1.bf16.msra.mxu0 0
      %288 = vmatprep.subr.bf16.mxu0 0
      %289 = vmatpush1.bf16.msra.mxu0 0
      %290 = vmatprep.subr.bf16.mxu0 0
      %291 = vmatpush1.bf16.msra.mxu0 %v274
      %292 = vmatprep.subr.bf16.mxu0 0
      %293 = vmatpush2.bf16.msra.mxu0 0
      %294 = vmatprep.subr.bf16.mxu0 0
      %295 = vmatpush2.bf16.msra.mxu0 0
      %296 = vmatprep.subr.bf16.mxu0 0
      %297 = vmatpush2.bf16.msra.mxu0 0
      %298 = vmatprep.subr.bf16.mxu0 0
      %299 = vmatpush2.bf16.msra.mxu0 0
      %300 = vmatprep.subr.bf16.mxu0 0
      %301 = vmatpush2.bf16.msra.mxu0 0
      %302 = vmatprep.subr.bf16.mxu0 0
      %303 = vmatpush2.bf16.msra.mxu0 0
      %304 = vmatprep.subr.bf16.mxu0 0
      %305 = vmatpush2.bf16.msra.mxu0 0
      %306 = vmatprep.subr.bf16.mxu0 0
      %307 = vmatpush2.bf16.msra.mxu0 0
      %308 = vmatprep.mubr.bf16.mxu0 0
      %309 = vmatmul.mubr.bf16.gmra.mxu0 %v258
      %v310 = vpop.f32.mrf.mxu0
      %v311 = vadd.f32 0.0, %v310
      %v312 = vpop.f32.mrf.mxu0
      %v313 = vpop.f32.mrf.mxu0
      %v314 = vadd.f32 0.0, %v313
      %v315 = vpop.f32.mrf.mxu0
      %316 = vmatprep.mubr.bf16.mxu0 0
      %317 = vmatmul.mubr.bf16.gmra.mxu0 %v261
      %v318 = vpop.f32.mrf.mxu0
      %v319 = vadd.f32 0.0, %v318
      %v320 = vpop.f32.mrf.mxu0
      %v321 = vpop.f32.mrf.mxu0
      %v322 = vadd.f32 0.0, %v321
      %v323 = vpop.f32.mrf.mxu0
      %324 = vmatprep.mubr.bf16.mxu0 0
      %325 = vmatmul.mubr.bf16.gmra.mxu0 %v264
      %v326 = vpop.f32.mrf.mxu0
      %v327 = vadd.f32 0.0, %v326
      %v328 = vpop.f32.mrf.mxu0
      %v329 = vpop.f32.mrf.mxu0
      %v330 = vadd.f32 0.0, %v329
      %v331 = vpop.f32.mrf.mxu0
      %332 = vmatprep.mubr.bf16.mxu0 0
      %333 = vmatmul.mubr.bf16.gmra.mxu0 %v267
      %v334 = vpop.f32.mrf.mxu0
      %v335 = vadd.f32 0.0, %v334
      %v336 = vpop.f32.mrf.mxu0
      %v337 = vpop.f32.mrf.mxu0
      %v338 = vadd.f32 0.0, %v337
      %v339 = vpop.f32.mrf.mxu0
      %340 = vmatprep.mubr.bf16.mxu0 0
      %341 = vmatmul.mubr.bf16.gmra.mxu0 %v270
      %v342 = vpop.f32.mrf.mxu0
      %v343 = vadd.f32 0.0, %v342
      %v344 = vpop.f32.mrf.mxu0
      %v345 = vpop.f32.mrf.mxu0
      %v346 = vpop.f32.mrf.mxu0
      %347 = vdwg.mxu0
      %v348 = vsel %vm256, %v207, 0
      %v350 = vsel %vm256, %v208, 0
      %v352 = vsel %vm256, %v209, 0
      %v354 = vsel %vm256, %v210, 0
      %v357 = vsel %vm256, %v211, 0
      %v360 = vsel %vm272, %v212, 0
      %362 = vmatprep.subr.bf16.mxu0 0
      %363 = vmatpush1.bf16.msra.mxu0 0
      %364 = vmatprep.subr.bf16.mxu0 0
      %365 = vmatpush1.bf16.msra.mxu0 0
      %366 = vmatprep.subr.bf16.mxu0 0
      %367 = vmatpush1.bf16.msra.mxu0 0
      %368 = vmatprep.subr.bf16.mxu0 0
      %369 = vmatpush1.bf16.msra.mxu0 0
      %370 = vmatprep.subr.bf16.mxu0 0
      %371 = vmatpush1.bf16.msra.mxu0 0
      %372 = vmatprep.subr.bf16.mxu0 0
      %373 = vmatpush1.bf16.msra.mxu0 0
      %374 = vmatprep.subr.bf16.mxu0 0
      %375 = vmatpush1.bf16.msra.mxu0 0
      %376 = vmatprep.subr.bf16.mxu0 0
      %377 = vmatpush1.bf16.msra.mxu0 %v360
      %378 = vmatprep.subr.bf16.mxu0 0
      %379 = vmatpush2.bf16.msra.mxu0 0
      %380 = vmatprep.subr.bf16.mxu0 0
      %381 = vmatpush2.bf16.msra.mxu0 0
      %382 = vmatprep.subr.bf16.mxu0 0
      %383 = vmatpush2.bf16.msra.mxu0 0
      %384 = vmatprep.subr.bf16.mxu0 0
      %385 = vmatpush2.bf16.msra.mxu0 0
      %386 = vmatprep.subr.bf16.mxu0 0
      %387 = vmatpush2.bf16.msra.mxu0 0
      %388 = vmatprep.subr.bf16.mxu0 0
      %389 = vmatpush2.bf16.msra.mxu0 0
      %390 = vmatprep.subr.bf16.mxu0 0
      %391 = vmatpush2.bf16.msra.mxu0 0
      %392 = vmatprep.subr.bf16.mxu0 0
      %393 = vmatpush2.bf16.msra.mxu0 0
      %394 = vmatprep.mubr.bf16.mxu0 0
      %395 = vmatmul.mubr.bf16.gmra.mxu0 %v348
      %v396 = vpop.f32.mrf.mxu0
      %v397 = vadd.f32 %v311, %v396
      %v398 = vpop.f32.mrf.mxu0
      %v399 = vpop.f32.mrf.mxu0
      %v400 = vadd.f32 %v314, %v399
      %v401 = vpop.f32.mrf.mxu0
      %402 = vmatprep.mubr.bf16.mxu0 0
      %403 = vmatmul.mubr.bf16.gmra.mxu0 %v350
      %v404 = vpop.f32.mrf.mxu0
      %v405 = vadd.f32 %v319, %v404
      %v406 = vpop.f32.mrf.mxu0
      %v407 = vpop.f32.mrf.mxu0
      %v408 = vadd.f32 %v322, %v407
      %v409 = vpop.f32.mrf.mxu0
      %410 = vmatprep.mubr.bf16.mxu0 0
      %411 = vmatmul.mubr.bf16.gmra.mxu0 %v352
      %v412 = vpop.f32.mrf.mxu0
      %v413 = vadd.f32 %v327, %v412
      %v414 = vpop.f32.mrf.mxu0
      %v415 = vpop.f32.mrf.mxu0
      %v416 = vadd.f32 %v330, %v415
      %v417 = vpop.f32.mrf.mxu0
      %418 = vmatprep.mubr.bf16.mxu0 0
      %419 = vmatmul.mubr.bf16.gmra.mxu0 %v354
      %v420 = vpop.f32.mrf.mxu0
      %v421 = vadd.f32 %v335, %v420
      %v422 = vpop.f32.mrf.mxu0
      %v423 = vpop.f32.mrf.mxu0
      %v424 = vadd.f32 %v338, %v423
      %v425 = vpop.f32.mrf.mxu0
      %426 = vmatprep.mubr.bf16.mxu0 0
      %427 = vmatmul.mubr.bf16.gmra.mxu0 %v357
      %v428 = vpop.f32.mrf.mxu0
      %v429 = vadd.f32 %v343, %v428
      %v430 = vpop.f32.mrf.mxu0
      %v431 = vpop.f32.mrf.mxu0
      %v432 = vpop.f32.mrf.mxu0
      %433 = vdwg.mxu0
      %s434 = scalar_lea.vmem %s1, 4
      %v435 = vld [vmem:[%s434] sm:$0x3]
      %vm441 = vcmask 1046528
      %v442 = vrot.slane %v207, 1
      %v443 = vrot.slane %v208, 1
      %v444 = vsel %vm441, %v442, %v443
      %v445 = vrot.slane %v209, 1
      %v446 = vsel %vm441, %v443, %v445
      %v447 = vrot.slane %v210, 1
      %v448 = vsel %vm441, %v445, %v447
      %v449 = vrot.slane %v213, 1
      %v450 = vsel %vm441, %v447, %v449
      %v452 = vsel %vm256, %v444, 0
      %v455 = vsel %vm256, %v446, 0
      %v458 = vsel %vm256, %v448, 0
      %v461 = vsel %vm256, %v450, 0
      %v464 = vsel %vm256, %v449, 0
      %v467 = vsel %vm272, %v435, 0
      %469 = vmatprep.subr.bf16.mxu0 0
      %470 = vmatpush1.bf16.msra.mxu0 0
      %471 = vmatprep.subr.bf16.mxu0 0
      %472 = vmatpush1.bf16.msra.mxu0 0
      %473 = vmatprep.subr.bf16.mxu0 0
      %474 = vmatpush1.bf16.msra.mxu0 0
      %475 = vmatprep.subr.bf16.mxu0 0
      %476 = vmatpush1.bf16.msra.mxu0 0
      %477 = vmatprep.subr.bf16.mxu0 0
      %478 = vmatpush1.bf16.msra.mxu0 0
      %479 = vmatprep.subr.bf16.mxu0 0
      %480 = vmatpush1.bf16.msra.mxu0 0
      %481 = vmatprep.subr.bf16.mxu0 0
      %482 = vmatpush1.bf16.msra.mxu0 0
      %483 = vmatprep.subr.bf16.mxu0 0
      %484 = vmatpush1.bf16.msra.mxu0 %v467
      %485 = vmatprep.subr.bf16.mxu0 0
      %486 = vmatpush2.bf16.msra.mxu0 0
      %487 = vmatprep.subr.bf16.mxu0 0
      %488 = vmatpush2.bf16.msra.mxu0 0
      %489 = vmatprep.subr.bf16.mxu0 0
      %490 = vmatpush2.bf16.msra.mxu0 0
      %491 = vmatprep.subr.bf16.mxu0 0
      %492 = vmatpush2.bf16.msra.mxu0 0
      %493 = vmatprep.subr.bf16.mxu0 0
      %494 = vmatpush2.bf16.msra.mxu0 0
      %495 = vmatprep.subr.bf16.mxu0 0
      %496 = vmatpush2.bf16.msra.mxu0 0
      %497 = vmatprep.subr.bf16.mxu0 0
      %498 = vmatpush2.bf16.msra.mxu0 0
      %499 = vmatprep.subr.bf16.mxu0 0
      %500 = vmatpush2.bf16.msra.mxu0 0
      %501 = vmatprep.mubr.bf16.mxu0 0
      %502 = vmatmul.mubr.bf16.gmra.mxu0 %v452
      %v503 = vpop.f32.mrf.mxu0
      %v504 = vadd.f32 0.0, %v503
      %v505 = vpop.f32.mrf.mxu0
      %v506 = vpop.f32.mrf.mxu0
      %v507 = vadd.f32 0.0, %v506
      %v508 = vpop.f32.mrf.mxu0
      %509 = vmatprep.mubr.bf16.mxu0 0
      %510 = vmatmul.mubr.bf16.gmra.mxu0 %v455
      %v511 = vpop.f32.mrf.mxu0
      %v512 = vadd.f32 0.0, %v511
      %v513 = vpop.f32.mrf.mxu0
      %v514 = vpop.f32.mrf.mxu0
      %v515 = vadd.f32 0.0, %v514
      %v516 = vpop.f32.mrf.mxu0
      %517 = vmatprep.mubr.bf16.mxu0 0
      %518 = vmatmul.mubr.bf16.gmra.mxu0 %v458
      %v519 = vpop.f32.mrf.mxu0
      %v520 = vadd.f32 0.0, %v519
      %v521 = vpop.f32.mrf.mxu0
      %v522 = vpop.f32.mrf.mxu0
      %v523 = vadd.f32 0.0, %v522
      %v524 = vpop.f32.mrf.mxu0
      %525 = vmatprep.mubr.bf16.mxu0 0
      %526 = vmatmul.mubr.bf16.gmra.mxu0 %v461
      %v527 = vpop.f32.mrf.mxu0
      %v528 = vadd.f32 0.0, %v527
      %v529 = vpop.f32.mrf.mxu0
      %v530 = vpop.f32.mrf.mxu0
      %v531 = vadd.f32 0.0, %v530
      %v532 = vpop.f32.mrf.mxu0
      %533 = vmatprep.mubr.bf16.mxu0 0
      %534 = vmatmul.mubr.bf16.gmra.mxu0 %v464
      %v535 = vpop.f32.mrf.mxu0
      %v536 = vadd.f32 0.0, %v535
      %v537 = vpop.f32.mrf.mxu0
      %v538 = vpop.f32.mrf.mxu0
      %v539 = vpop.f32.mrf.mxu0
      %540 = vdwg.mxu0
      %v541 = vadd.f32 %v397, %v504
      %v542 = vadd.f32 %v400, %v507
      %v543 = vadd.f32 %v405, %v512
      %v544 = vadd.f32 %v408, %v515
      %v545 = vadd.f32 %v413, %v520
      %v546 = vadd.f32 %v416, %v523
      %v547 = vadd.f32 %v421, %v528
      %v548 = vadd.f32 %v424, %v531
      %v549 = vadd.f32 %v429, %v536
      %v550 = vpack.c.bf16 %v204, %v203
      %s551 = scalar_lea.vmem %s1, 6
      %v552 = vld [vmem:[%s551] sm:$0x3]
      %v554 = vrot.slane %v550, 1
      %v555 = vsel %vm441, %v449, %v554
      %v557 = vsel %vm256, %v555, 0
      %v560 = vsel %vm256, %v554, 0
      %v563 = vsel %vm272, %v552, 0
      %565 = vmatprep.subr.bf16.mxu0 0
      %566 = vmatpush1.bf16.msra.mxu0 0
      %567 = vmatprep.subr.bf16.mxu0 0
      %568 = vmatpush1.bf16.msra.mxu0 0
      %569 = vmatprep.subr.bf16.mxu0 0
      %570 = vmatpush1.bf16.msra.mxu0 0
      %571 = vmatprep.subr.bf16.mxu0 0
      %572 = vmatpush1.bf16.msra.mxu0 0
      %573 = vmatprep.subr.bf16.mxu0 0
      %574 = vmatpush1.bf16.msra.mxu0 0
      %575 = vmatprep.subr.bf16.mxu0 0
      %576 = vmatpush1.bf16.msra.mxu0 0
      %577 = vmatprep.subr.bf16.mxu0 0
      %578 = vmatpush1.bf16.msra.mxu0 0
      %579 = vmatprep.subr.bf16.mxu0 0
      %580 = vmatpush1.bf16.msra.mxu0 %v563
      %581 = vmatprep.subr.bf16.mxu0 0
      %582 = vmatpush2.bf16.msra.mxu0 0
      %583 = vmatprep.subr.bf16.mxu0 0
      %584 = vmatpush2.bf16.msra.mxu0 0
      %585 = vmatprep.subr.bf16.mxu0 0
      %586 = vmatpush2.bf16.msra.mxu0 0
      %587 = vmatprep.subr.bf16.mxu0 0
      %588 = vmatpush2.bf16.msra.mxu0 0
      %589 = vmatprep.subr.bf16.mxu0 0
      %590 = vmatpush2.bf16.msra.mxu0 0
      %591 = vmatprep.subr.bf16.mxu0 0
      %592 = vmatpush2.bf16.msra.mxu0 0
      %593 = vmatprep.subr.bf16.mxu0 0
      %594 = vmatpush2.bf16.msra.mxu0 0
      %595 = vmatprep.subr.bf16.mxu0 0
      %596 = vmatpush2.bf16.msra.mxu0 0
      %597 = vmatprep.mubr.bf16.mxu0 0
      %598 = vmatmul.mubr.bf16.gmra.mxu0 %v455
      %v599 = vpop.f32.mrf.mxu0
      %v600 = vadd.f32 0.0, %v599
      %v601 = vpop.f32.mrf.mxu0
      %v602 = vpop.f32.mrf.mxu0
      %v603 = vadd.f32 0.0, %v602
      %v604 = vpop.f32.mrf.mxu0
      %605 = vmatprep.mubr.bf16.mxu0 0
      %606 = vmatmul.mubr.bf16.gmra.mxu0 %v458
      %v607 = vpop.f32.mrf.mxu0
      %v608 = vadd.f32 0.0, %v607
      %v609 = vpop.f32.mrf.mxu0
      %v610 = vpop.f32.mrf.mxu0
      %v611 = vadd.f32 0.0, %v610
      %v612 = vpop.f32.mrf.mxu0
      %613 = vmatprep.mubr.bf16.mxu0 0
      %614 = vmatmul.mubr.bf16.gmra.mxu0 %v461
      %v615 = vpop.f32.mrf.mxu0
      %v616 = vadd.f32 0.0, %v615
      %v617 = vpop.f32.mrf.mxu0
      %v618 = vpop.f32.mrf.mxu0
      %v619 = vadd.f32 0.0, %v618
      %v620 = vpop.f32.mrf.mxu0
      %621 = vmatprep.mubr.bf16.mxu0 0
      %622 = vmatmul.mubr.bf16.gmra.mxu0 %v557
      %v623 = vpop.f32.mrf.mxu0
      %v624 = vadd.f32 0.0, %v623
      %v625 = vpop.f32.mrf.mxu0
      %v626 = vpop.f32.mrf.mxu0
      %v627 = vadd.f32 0.0, %v626
      %v628 = vpop.f32.mrf.mxu0
      %629 = vmatprep.mubr.bf16.mxu0 0
      %630 = vmatmul.mubr.bf16.gmra.mxu0 %v560
      %v631 = vpop.f32.mrf.mxu0
      %v632 = vadd.f32 0.0, %v631
      %v633 = vpop.f32.mrf.mxu0
      %v634 = vpop.f32.mrf.mxu0
      %v635 = vpop.f32.mrf.mxu0
      %636 = vdwg.mxu0
      %v637 = vadd.f32 %v541, %v600
      %v638 = vadd.f32 %v542, %v603
      %v639 = vadd.f32 %v543, %v608
      %v640 = vadd.f32 %v544, %v611
      %v641 = vadd.f32 %v545, %v616
      %v642 = vadd.f32 %v546, %v619
      %v643 = vadd.f32 %v547, %v624
      %v644 = vadd.f32 %v548, %v627
      %v645 = vadd.f32 %v549, %v632
      %s646 = scalar_lea.vmem %s1, 8
      %v647 = vld [vmem:[%s646] sm:$0x3]
      %vm648 = vsmask.f32 6400
      %v649 = vrot.slane %v229, 1
      %v650 = vrot.slane %v225, 2
      %v651 = vor.u32 %v649, %v650
      %v652 = vrot.slane %v237, 1
      %v653 = vrot.slane %v233, 2
      %v654 = vor.u32 %v652, %v653
      %v655 = vsel %vm648, %v651, %v654
      %v656 = vrot.slane %v245, 1
      %v657 = vrot.slane %v241, 2
      %v658 = vor.u32 %v656, %v657
      %v659 = vsel %vm648, %v654, %v658
      %v660 = vrot.slane %v253, 1
      %v661 = vrot.slane %v249, 2
      %v662 = vor.u32 %v660, %v661
      %v663 = vsel %vm648, %v658, %v662
      %v665 = vshrl.u32 %v550, 16
      %v667 = vrot.slane %v665, 1
      %v668 = vshll.u32 %v550, 16
      %v670 = vrot.slane %v668, 2
      %v671 = vor.u32 %v667, %v670
      %v672 = vsel %vm648, %v662, %v671
      %v674 = vsel %vm256, %v655, 0
      %v677 = vsel %vm256, %v659, 0
      %v680 = vsel %vm256, %v663, 0
      %v683 = vsel %vm256, %v672, 0
      %v686 = vsel %vm256, %v671, 0
      %v689 = vsel %vm272, %v647, 0
      %691 = vmatprep.subr.bf16.mxu0 0
      %692 = vmatpush1.bf16.msra.mxu0 0
      %693 = vmatprep.subr.bf16.mxu0 0
      %694 = vmatpush1.bf16.msra.mxu0 0
      %695 = vmatprep.subr.bf16.mxu0 0
      %696 = vmatpush1.bf16.msra.mxu0 0
      %697 = vmatprep.subr.bf16.mxu0 0
      %698 = vmatpush1.bf16.msra.mxu0 0
      %699 = vmatprep.subr.bf16.mxu0 0
      %700 = vmatpush1.bf16.msra.mxu0 0
      %701 = vmatprep.subr.bf16.mxu0 0
      %702 = vmatpush1.bf16.msra.mxu0 0
      %703 = vmatprep.subr.bf16.mxu0 0
      %704 = vmatpush1.bf16.msra.mxu0 0
      %705 = vmatprep.subr.bf16.mxu0 0
      %706 = vmatpush1.bf16.msra.mxu0 %v689
      %707 = vmatprep.subr.bf16.mxu0 0
      %708 = vmatpush2.bf16.msra.mxu0 0
      %709 = vmatprep.subr.bf16.mxu0 0
      %710 = vmatpush2.bf16.msra.mxu0 0
      %711 = vmatprep.subr.bf16.mxu0 0
      %712 = vmatpush2.bf16.msra.mxu0 0
      %713 = vmatprep.subr.bf16.mxu0 0
      %714 = vmatpush2.bf16.msra.mxu0 0
      %715 = vmatprep.subr.bf16.mxu0 0
      %716 = vmatpush2.bf16.msra.mxu0 0
      %717 = vmatprep.subr.bf16.mxu0 0
      %718 = vmatpush2.bf16.msra.mxu0 0
      %719 = vmatprep.subr.bf16.mxu0 0
      %720 = vmatpush2.bf16.msra.mxu0 0
      %721 = vmatprep.subr.bf16.mxu0 0
      %722 = vmatpush2.bf16.msra.mxu0 0
      %723 = vmatprep.mubr.bf16.mxu0 0
      %724 = vmatmul.mubr.bf16.gmra.mxu0 %v674
      %v725 = vpop.f32.mrf.mxu0
      %v726 = vadd.f32 0.0, %v725
      %v727 = vpop.f32.mrf.mxu0
      %v728 = vpop.f32.mrf.mxu0
      %v729 = vadd.f32 0.0, %v728
      %v730 = vpop.f32.mrf.mxu0
      %731 = vmatprep.mubr.bf16.mxu0 0
      %732 = vmatmul.mubr.bf16.gmra.mxu0 %v677
      %v733 = vpop.f32.mrf.mxu0
      %v734 = vadd.f32 0.0, %v733
      %v735 = vpop.f32.mrf.mxu0
      %v736 = vpop.f32.mrf.mxu0
      %v737 = vadd.f32 0.0, %v736
      %v738 = vpop.f32.mrf.mxu0
      %739 = vmatprep.mubr.bf16.mxu0 0
      %740 = vmatmul.mubr.bf16.gmra.mxu0 %v680
      %v741 = vpop.f32.mrf.mxu0
      %v742 = vadd.f32 0.0, %v741
      %v743 = vpop.f32.mrf.mxu0
      %v744 = vpop.f32.mrf.mxu0
      %v745 = vadd.f32 0.0, %v744
      %v746 = vpop.f32.mrf.mxu0
      %747 = vmatprep.mubr.bf16.mxu0 0
      %748 = vmatmul.mubr.bf16.gmra.mxu0 %v683
      %v749 = vpop.f32.mrf.mxu0
      %v750 = vadd.f32 0.0, %v749
      %v751 = vpop.f32.mrf.mxu0
      %v752 = vpop.f32.mrf.mxu0
      %v753 = vadd.f32 0.0, %v752
      %v754 = vpop.f32.mrf.mxu0
      %755 = vmatprep.mubr.bf16.mxu0 0
      %756 = vmatmul.mubr.bf16.gmra.mxu0 %v686
      %v757 = vpop.f32.mrf.mxu0
      %v758 = vadd.f32 0.0, %v757
      %v759 = vpop.f32.mrf.mxu0
      %v760 = vpop.f32.mrf.mxu0
      %v761 = vpop.f32.mrf.mxu0
      %762 = vdwg.mxu0
      %v763 = vadd.f32 %v637, %v726
      %v764 = vadd.f32 %v638, %v729
      %v765 = vadd.f32 %v639, %v734
      %v766 = vadd.f32 %v640, %v737
      %v767 = vadd.f32 %v641, %v742
      %v768 = vadd.f32 %v642, %v745
      %v769 = vadd.f32 %v643, %v750
      %v770 = vadd.f32 %v644, %v753
      %v771 = vadd.f32 %v645, %v758
      %s772 = scalar_lea.vmem %s1, 10
      %v773 = vld [vmem:[%s772] sm:$0x3]
      %vm774 = vcmask 1045504
      %v775 = vrot.slane %v208, 2
      %v776 = vrot.slane %v209, 2
      %v777 = vsel %vm774, %v775, %v776
      %v778 = vrot.slane %v210, 2
      %v779 = vsel %vm774, %v776, %v778
      %v780 = vrot.slane %v213, 2
      %v781 = vsel %vm774, %v778, %v780
      %v782 = vrot.slane %v550, 2
      %v783 = vsel %vm774, %v780, %v782
      %v785 = vsel %vm256, %v777, 0
      %v788 = vsel %vm256, %v779, 0
      %v791 = vsel %vm256, %v781, 0
      %v794 = vsel %vm256, %v783, 0
      %v797 = vsel %vm256, %v782, 0
      %v800 = vsel %vm272, %v773, 0
      %802 = vmatprep.subr.bf16.mxu0 0
      %803 = vmatpush1.bf16.msra.mxu0 0
      %804 = vmatprep.subr.bf16.mxu0 0
      %805 = vmatpush1.bf16.msra.mxu0 0
      %806 = vmatprep.subr.bf16.mxu0 0
      %807 = vmatpush1.bf16.msra.mxu0 0
      %808 = vmatprep.subr.bf16.mxu0 0
      %809 = vmatpush1.bf16.msra.mxu0 0
      %810 = vmatprep.subr.bf16.mxu0 0
      %811 = vmatpush1.bf16.msra.mxu0 0
      %812 = vmatprep.subr.bf16.mxu0 0
      %813 = vmatpush1.bf16.msra.mxu0 0
      %814 = vmatprep.subr.bf16.mxu0 0
      %815 = vmatpush1.bf16.msra.mxu0 0
      %816 = vmatprep.subr.bf16.mxu0 0
      %817 = vmatpush1.bf16.msra.mxu0 %v800
      %818 = vmatprep.subr.bf16.mxu0 0
      %819 = vmatpush2.bf16.msra.mxu0 0
      %820 = vmatprep.subr.bf16.mxu0 0
      %821 = vmatpush2.bf16.msra.mxu0 0
      %822 = vmatprep.subr.bf16.mxu0 0
      %823 = vmatpush2.bf16.msra.mxu0 0
      %824 = vmatprep.subr.bf16.mxu0 0
      %825 = vmatpush2.bf16.msra.mxu0 0
      %826 = vmatprep.subr.bf16.mxu0 0
      %827 = vmatpush2.bf16.msra.mxu0 0
      %828 = vmatprep.subr.bf16.mxu0 0
      %829 = vmatpush2.bf16.msra.mxu0 0
      %830 = vmatprep.subr.bf16.mxu0 0
      %831 = vmatpush2.bf16.msra.mxu0 0
      %832 = vmatprep.subr.bf16.mxu0 0
      %833 = vmatpush2.bf16.msra.mxu0 0
      %834 = vmatprep.mubr.bf16.mxu0 0
      %835 = vmatmul.mubr.bf16.gmra.mxu0 %v785
      %v836 = vpop.f32.mrf.mxu0
      %v837 = vadd.f32 0.0, %v836
      %v838 = vpop.f32.mrf.mxu0
      %v839 = vpop.f32.mrf.mxu0
      %v840 = vadd.f32 0.0, %v839
      %v841 = vpop.f32.mrf.mxu0
      %842 = vmatprep.mubr.bf16.mxu0 0
      %843 = vmatmul.mubr.bf16.gmra.mxu0 %v788
      %v844 = vpop.f32.mrf.mxu0
      %v845 = vadd.f32 0.0, %v844
      %v846 = vpop.f32.mrf.mxu0
      %v847 = vpop.f32.mrf.mxu0
      %v848 = vadd.f32 0.0, %v847
      %v849 = vpop.f32.mrf.mxu0
      %850 = vmatprep.mubr.bf16.mxu0 0
      %851 = vmatmul.mubr.bf16.gmra.mxu0 %v791
      %v852 = vpop.f32.mrf.mxu0
      %v853 = vadd.f32 0.0, %v852
      %v854 = vpop.f32.mrf.mxu0
      %v855 = vpop.f32.mrf.mxu0
      %v856 = vadd.f32 0.0, %v855
      %v857 = vpop.f32.mrf.mxu0
      %858 = vmatprep.mubr.bf16.mxu0 0
      %859 = vmatmul.mubr.bf16.gmra.mxu0 %v794
      %v860 = vpop.f32.mrf.mxu0
      %v861 = vadd.f32 0.0, %v860
      %v862 = vpop.f32.mrf.mxu0
      %v863 = vpop.f32.mrf.mxu0
      %v864 = vadd.f32 0.0, %v863
      %v865 = vpop.f32.mrf.mxu0
      %866 = vmatprep.mubr.bf16.mxu0 0
      %867 = vmatmul.mubr.bf16.gmra.mxu0 %v797
      %v868 = vpop.f32.mrf.mxu0
      %v869 = vadd.f32 0.0, %v868
      %v870 = vpop.f32.mrf.mxu0
      %v871 = vpop.f32.mrf.mxu0
      %v872 = vpop.f32.mrf.mxu0
      %873 = vdwg.mxu0
      %v874 = vadd.f32 %v763, %v837
      %v875 = vadd.f32 %v764, %v840
      %v876 = vadd.f32 %v765, %v845
      %v877 = vadd.f32 %v766, %v848
      %v878 = vadd.f32 %v767, %v853
      %v879 = vadd.f32 %v768, %v856
      %v880 = vadd.f32 %v769, %v861
      %v881 = vadd.f32 %v770, %v864
      %v882 = vadd.f32 %v771, %v869
      %v883 = vpack.c.bf16 %v206, %v205
      %s884 = scalar_lea.vmem %s1, 12
      %v885 = vld [vmem:[%s884] sm:$0x3]
      %v887 = vrot.slane %v883, 2
      %v888 = vsel %vm774, %v782, %v887
      %v890 = vsel %vm256, %v888, 0
      %v893 = vsel %vm256, %v887, 0
      %v896 = vsel %vm272, %v885, 0
      %898 = vmatprep.subr.bf16.mxu0 0
      %899 = vmatpush1.bf16.msra.mxu0 0
      %900 = vmatprep.subr.bf16.mxu0 0
      %901 = vmatpush1.bf16.msra.mxu0 0
      %902 = vmatprep.subr.bf16.mxu0 0
      %903 = vmatpush1.bf16.msra.mxu0 0
      %904 = vmatprep.subr.bf16.mxu0 0
      %905 = vmatpush1.bf16.msra.mxu0 0
      %906 = vmatprep.subr.bf16.mxu0 0
      %907 = vmatpush1.bf16.msra.mxu0 0
      %908 = vmatprep.subr.bf16.mxu0 0
      %909 = vmatpush1.bf16.msra.mxu0 0
      %910 = vmatprep.subr.bf16.mxu0 0
      %911 = vmatpush1.bf16.msra.mxu0 0
      %912 = vmatprep.subr.bf16.mxu0 0
      %913 = vmatpush1.bf16.msra.mxu0 %v896
      %914 = vmatprep.subr.bf16.mxu0 0
      %915 = vmatpush2.bf16.msra.mxu0 0
      %916 = vmatprep.subr.bf16.mxu0 0
      %917 = vmatpush2.bf16.msra.mxu0 0
      %918 = vmatprep.subr.bf16.mxu0 0
      %919 = vmatpush2.bf16.msra.mxu0 0
      %920 = vmatprep.subr.bf16.mxu0 0
      %921 = vmatpush2.bf16.msra.mxu0 0
      %922 = vmatprep.subr.bf16.mxu0 0
      %923 = vmatpush2.bf16.msra.mxu0 0
      %924 = vmatprep.subr.bf16.mxu0 0
      %925 = vmatpush2.bf16.msra.mxu0 0
      %926 = vmatprep.subr.bf16.mxu0 0
      %927 = vmatpush2.bf16.msra.mxu0 0
      %928 = vmatprep.subr.bf16.mxu0 0
      %929 = vmatpush2.bf16.msra.mxu0 0
      %930 = vmatprep.mubr.bf16.mxu0 0
      %931 = vmatmul.mubr.bf16.gmra.mxu0 %v788
      %v932 = vpop.f32.mrf.mxu0
      %v933 = vadd.f32 0.0, %v932
      %v934 = vpop.f32.mrf.mxu0
      %v935 = vpop.f32.mrf.mxu0
      %v936 = vadd.f32 0.0, %v935
      %v937 = vpop.f32.mrf.mxu0
      %938 = vmatprep.mubr.bf16.mxu0 0
      %939 = vmatmul.mubr.bf16.gmra.mxu0 %v791
      %v940 = vpop.f32.mrf.mxu0
      %v941 = vadd.f32 0.0, %v940
      %v942 = vpop.f32.mrf.mxu0
      %v943 = vpop.f32.mrf.mxu0
      %v944 = vadd.f32 0.0, %v943
      %v945 = vpop.f32.mrf.mxu0
      %946 = vmatprep.mubr.bf16.mxu0 0
      %947 = vmatmul.mubr.bf16.gmra.mxu0 %v794
      %v948 = vpop.f32.mrf.mxu0
      %v949 = vadd.f32 0.0, %v948
      %v950 = vpop.f32.mrf.mxu0
      %v951 = vpop.f32.mrf.mxu0
      %v952 = vadd.f32 0.0, %v951
      %v953 = vpop.f32.mrf.mxu0
      %954 = vmatprep.mubr.bf16.mxu0 0
      %955 = vmatmul.mubr.bf16.gmra.mxu0 %v890
      %v956 = vpop.f32.mrf.mxu0
      %v957 = vadd.f32 0.0, %v956
      %v958 = vpop.f32.mrf.mxu0
      %v959 = vpop.f32.mrf.mxu0
      %v960 = vadd.f32 0.0, %v959
      %v961 = vpop.f32.mrf.mxu0
      %962 = vmatprep.mubr.bf16.mxu0 0
      %963 = vmatmul.mubr.bf16.gmra.mxu0 %v893
      %v964 = vpop.f32.mrf.mxu0
      %v965 = vadd.f32 0.0, %v964
      %v966 = vpop.f32.mrf.mxu0
      %v967 = vpop.f32.mrf.mxu0
      %v968 = vpop.f32.mrf.mxu0
      %969 = vdwg.mxu0
      %v970 = vadd.f32 %v874, %v933
      %v971 = vadd.f32 %v875, %v936
      %v972 = vadd.f32 %v876, %v941
      %v973 = vadd.f32 %v877, %v944
      %v974 = vadd.f32 %v878, %v949
      %v975 = vadd.f32 %v879, %v952
      %v976 = vadd.f32 %v880, %v957
      %v977 = vadd.f32 %v881, %v960
      %v978 = vadd.f32 %v882, %v965
      %s979 = scalar_lea.vmem %s1, 14
      %v980 = vld [vmem:[%s979] sm:$0x3]
      %vm981 = vsmask.f32 5376
      %v982 = vrot.slane %v237, 2
      %v983 = vrot.slane %v233, 3
      %v984 = vor.u32 %v982, %v983
      %v985 = vrot.slane %v245, 2
      %v986 = vrot.slane %v241, 3
      %v987 = vor.u32 %v985, %v986
      %v988 = vsel %vm981, %v984, %v987
      %v989 = vrot.slane %v253, 2
      %v990 = vrot.slane %v249, 3
      %v991 = vor.u32 %v989, %v990
      %v992 = vsel %vm981, %v987, %v991
      %v993 = vrot.slane %v665, 2
      %v994 = vrot.slane %v668, 3
      %v995 = vor.u32 %v993, %v994
      %v996 = vsel %vm981, %v991, %v995
      %v998 = vshrl.u32 %v883, 16
      %v1000 = vrot.slane %v998, 2
      %v1001 = vshll.u32 %v883, 16
      %v1003 = vrot.slane %v1001, 3
      %v1004 = vor.u32 %v1000, %v1003
      %v1005 = vsel %vm981, %v995, %v1004
      %v1007 = vsel %vm256, %v988, 0
      %v1010 = vsel %vm256, %v992, 0
      %v1013 = vsel %vm256, %v996, 0
      %v1016 = vsel %vm256, %v1005, 0
      %v1019 = vsel %vm256, %v1004, 0
      %v1022 = vsel %vm272, %v980, 0
      %1024 = vmatprep.subr.bf16.mxu0 0
      %1025 = vmatpush1.bf16.msra.mxu0 0
      %1026 = vmatprep.subr.bf16.mxu0 0
      %1027 = vmatpush1.bf16.msra.mxu0 0
      %1028 = vmatprep.subr.bf16.mxu0 0
      %1029 = vmatpush1.bf16.msra.mxu0 0
      %1030 = vmatprep.subr.bf16.mxu0 0
      %1031 = vmatpush1.bf16.msra.mxu0 0
      %1032 = vmatprep.subr.bf16.mxu0 0
      %1033 = vmatpush1.bf16.msra.mxu0 0
      %1034 = vmatprep.subr.bf16.mxu0 0
      %1035 = vmatpush1.bf16.msra.mxu0 0
      %1036 = vmatprep.subr.bf16.mxu0 0
      %1037 = vmatpush1.bf16.msra.mxu0 0
      %1038 = vmatprep.subr.bf16.mxu0 0
      %1039 = vmatpush1.bf16.msra.mxu0 %v1022
      %1040 = vmatprep.subr.bf16.mxu0 0
      %1041 = vmatpush2.bf16.msra.mxu0 0
      %1042 = vmatprep.subr.bf16.mxu0 0
      %1043 = vmatpush2.bf16.msra.mxu0 0
      %1044 = vmatprep.subr.bf16.mxu0 0
      %1045 = vmatpush2.bf16.msra.mxu0 0
      %1046 = vmatprep.subr.bf16.mxu0 0
      %1047 = vmatpush2.bf16.msra.mxu0 0
      %1048 = vmatprep.subr.bf16.mxu0 0
      %1049 = vmatpush2.bf16.msra.mxu0 0
      %1050 = vmatprep.subr.bf16.mxu0 0
      %1051 = vmatpush2.bf16.msra.mxu0 0
      %1052 = vmatprep.subr.bf16.mxu0 0
      %1053 = vmatpush2.bf16.msra.mxu0 0
      %1054 = vmatprep.subr.bf16.mxu0 0
      %1055 = vmatpush2.bf16.msra.mxu0 0
      %1056 = vmatprep.mubr.bf16.mxu0 0
      %1057 = vmatmul.mubr.bf16.gmra.mxu0 %v1007
      %v1058 = vpop.f32.mrf.mxu0
      %v1059 = vadd.f32 0.0, %v1058
      %v1060 = vpop.f32.mrf.mxu0
      %v1061 = vpop.f32.mrf.mxu0
      %v1062 = vadd.f32 0.0, %v1061
      %v1063 = vpop.f32.mrf.mxu0
      %1064 = vmatprep.mubr.bf16.mxu0 0
      %1065 = vmatmul.mubr.bf16.gmra.mxu0 %v1010
      %v1066 = vpop.f32.mrf.mxu0
      %v1067 = vadd.f32 0.0, %v1066
      %v1068 = vpop.f32.mrf.mxu0
      %v1069 = vpop.f32.mrf.mxu0
      %v1070 = vadd.f32 0.0, %v1069
      %v1071 = vpop.f32.mrf.mxu0
      %1072 = vmatprep.mubr.bf16.mxu0 0
      %1073 = vmatmul.mubr.bf16.gmra.mxu0 %v1013
      %v1074 = vpop.f32.mrf.mxu0
      %v1075 = vadd.f32 0.0, %v1074
      %v1076 = vpop.f32.mrf.mxu0
      %v1077 = vpop.f32.mrf.mxu0
      %v1078 = vadd.f32 0.0, %v1077
      %v1079 = vpop.f32.mrf.mxu0
      %1080 = vmatprep.mubr.bf16.mxu0 0
      %1081 = vmatmul.mubr.bf16.gmra.mxu0 %v1016
      %v1082 = vpop.f32.mrf.mxu0
      %v1083 = vadd.f32 0.0, %v1082
      %v1084 = vpop.f32.mrf.mxu0
      %v1085 = vpop.f32.mrf.mxu0
      %v1086 = vadd.f32 0.0, %v1085
      %v1087 = vpop.f32.mrf.mxu0
      %1088 = vmatprep.mubr.bf16.mxu0 0
      %1089 = vmatmul.mubr.bf16.gmra.mxu0 %v1019
      %v1090 = vpop.f32.mrf.mxu0
      %v1091 = vadd.f32 0.0, %v1090
      %v1092 = vpop.f32.mrf.mxu0
      %v1093 = vpop.f32.mrf.mxu0
      %v1094 = vpop.f32.mrf.mxu0
      %1095 = vdwg.mxu0
      %v1096 = vadd.f32 %v970, %v1059
      %v1097 = vadd.f32 %v971, %v1062
      %v1098 = vadd.f32 %v972, %v1067
      %v1099 = vadd.f32 %v973, %v1070
      %v1100 = vadd.f32 %v974, %v1075
      %v1101 = vadd.f32 %v975, %v1078
      %v1102 = vadd.f32 %v976, %v1083
      %v1103 = vadd.f32 %v977, %v1086
      %v1104 = vadd.f32 %v978, %v1091
      %s1105 = scalar_lea.vmem %s1, 16
      %v1106 = vld [vmem:[%s1105] sm:$0x3]
      %vm1107 = vcmask 1044480
      %v1108 = vrot.slane %v209, 3
      %v1109 = vrot.slane %v210, 3
      %v1110 = vsel %vm1107, %v1108, %v1109
      %v1111 = vrot.slane %v213, 3
      %v1112 = vsel %vm1107, %v1109, %v1111
      %v1113 = vrot.slane %v550, 3
      %v1114 = vsel %vm1107, %v1111, %v1113
      %v1115 = vrot.slane %v883, 3
      %v1116 = vsel %vm1107, %v1113, %v1115
      %v1118 = vsel %vm256, %v1110, 0
      %v1121 = vsel %vm256, %v1112, 0
      %v1124 = vsel %vm256, %v1114, 0
      %v1127 = vsel %vm256, %v1116, 0
      %v1130 = vsel %vm256, %v1115, 0
      %v1133 = vsel %vm272, %v1106, 0
      %1135 = vmatprep.subr.bf16.mxu0 0
      %1136 = vmatpush1.bf16.msra.mxu0 0
      %1137 = vmatprep.subr.bf16.mxu0 0
      %1138 = vmatpush1.bf16.msra.mxu0 0
      %1139 = vmatprep.subr.bf16.mxu0 0
      %1140 = vmatpush1.bf16.msra.mxu0 0
      %1141 = vmatprep.subr.bf16.mxu0 0
      %1142 = vmatpush1.bf16.msra.mxu0 0
      %1143 = vmatprep.subr.bf16.mxu0 0
      %1144 = vmatpush1.bf16.msra.mxu0 0
      %1145 = vmatprep.subr.bf16.mxu0 0
      %1146 = vmatpush1.bf16.msra.mxu0 0
      %1147 = vmatprep.subr.bf16.mxu0 0
      %1148 = vmatpush1.bf16.msra.mxu0 0
      %1149 = vmatprep.subr.bf16.mxu0 0
      %1150 = vmatpush1.bf16.msra.mxu0 %v1133
      %1151 = vmatprep.subr.bf16.mxu0 0
      %1152 = vmatpush2.bf16.msra.mxu0 0
      %1153 = vmatprep.subr.bf16.mxu0 0
      %1154 = vmatpush2.bf16.msra.mxu0 0
      %1155 = vmatprep.subr.bf16.mxu0 0
      %1156 = vmatpush2.bf16.msra.mxu0 0
      %1157 = vmatprep.subr.bf16.mxu0 0
      %1158 = vmatpush2.bf16.msra.mxu0 0
      %1159 = vmatprep.subr.bf16.mxu0 0
      %1160 = vmatpush2.bf16.msra.mxu0 0
      %1161 = vmatprep.subr.bf16.mxu0 0
      %1162 = vmatpush2.bf16.msra.mxu0 0
      %1163 = vmatprep.subr.bf16.mxu0 0
      %1164 = vmatpush2.bf16.msra.mxu0 0
      %1165 = vmatprep.subr.bf16.mxu0 0
      %1166 = vmatpush2.bf16.msra.mxu0 0
      %1167 = vmatprep.mubr.bf16.mxu0 0
      %1168 = vmatmul.mubr.bf16.gmra.mxu0 %v1118
      %v1169 = vpop.f32.mrf.mxu0
      %v1170 = vadd.f32 0.0, %v1169
      %v1171 = vpop.f32.mrf.mxu0
      %v1172 = vpop.f32.mrf.mxu0
      %v1173 = vadd.f32 0.0, %v1172
      %v1174 = vpop.f32.mrf.mxu0
      %1175 = vmatprep.mubr.bf16.mxu0 0
      %1176 = vmatmul.mubr.bf16.gmra.mxu0 %v1121
      %v1177 = vpop.f32.mrf.mxu0
      %v1178 = vadd.f32 0.0, %v1177
      %v1179 = vpop.f32.mrf.mxu0
      %v1180 = vpop.f32.mrf.mxu0
      %v1181 = vadd.f32 0.0, %v1180
      %v1182 = vpop.f32.mrf.mxu0
      %1183 = vmatprep.mubr.bf16.mxu0 0
      %1184 = vmatmul.mubr.bf16.gmra.mxu0 %v1124
      %v1185 = vpop.f32.mrf.mxu0
      %v1186 = vadd.f32 0.0, %v1185
      %v1187 = vpop.f32.mrf.mxu0
      %v1188 = vpop.f32.mrf.mxu0
      %v1189 = vadd.f32 0.0, %v1188
      %v1190 = vpop.f32.mrf.mxu0
      %1191 = vmatprep.mubr.bf16.mxu0 0
      %1192 = vmatmul.mubr.bf16.gmra.mxu0 %v1127
      %v1193 = vpop.f32.mrf.mxu0
      %v1194 = vadd.f32 0.0, %v1193
      %v1195 = vpop.f32.mrf.mxu0
      %v1196 = vpop.f32.mrf.mxu0
      %v1197 = vadd.f32 0.0, %v1196
      %v1198 = vpop.f32.mrf.mxu0
      %1199 = vmatprep.mubr.bf16.mxu0 0
      %1200 = vmatmul.mubr.bf16.gmra.mxu0 %v1130
      %v1201 = vpop.f32.mrf.mxu0
      %v1202 = vadd.f32 0.0, %v1201
      %v1203 = vpop.f32.mrf.mxu0
      %v1204 = vpop.f32.mrf.mxu0
      %v1205 = vpop.f32.mrf.mxu0
      %1206 = vdwg.mxu0
      %v1207 = vadd.f32 %v1096, %v1170
      %v1208 = vadd.f32 %v1097, %v1173
      %v1209 = vadd.f32 %v1098, %v1178
      %v1210 = vadd.f32 %v1099, %v1181
      %v1211 = vadd.f32 %v1100, %v1186
      %v1212 = vadd.f32 %v1101, %v1189
      %v1213 = vadd.f32 %v1102, %v1194
      %v1214 = vadd.f32 %v1103, %v1197
      %v1215 = vadd.f32 %v1104, %v1202
      %v1216 = vlaneseq
      %v1217 = vshrl.u32 %v1216, 7
      %v1218 = vadd.s32 %v1217, 8
      %v1219 = vadd.s32 %v1217, 16
      %v1220 = vadd.s32 %v1217, 24
      %v1221 = vadd.s32 %v1217, 32
      %v1222 = vadd.s32 %v1217, 40
      %v1223 = vadd.s32 %v1217, 48
      %v1224 = vadd.s32 %v1217, 56
      %v1225 = vadd.s32 %v1217, 64
      %vm1226 = vcmp.lt.s32.totalorder %v1217, 0
      %v1227 = vsub.s32 0, %v1217
      %v1228 = vsel %vm1226, %v1227, %v1217
      %v1229 = vmul.u32.u64.compose %v1228, 3817748708
      %v1230 = vextract.low.u32 %v1229
      %v1231 = vextract.high.u32 %v1229
      %v1232 = vshrl.u32 %v1231, 4
      %v1233 = vmul.u32 %v1232, 18
      %v1234 = vsub.s32 %v1228, %v1233
      %v1235 = vsub.s32 0, %v1234
      %v1236 = vsel %vm1226, %v1235, %v1234
      %vm1237 = vcmp.lt.s32.totalorder %v1218, 0
      %v1238 = vsub.s32 0, %v1218
      %v1239 = vsel %vm1237, %v1238, %v1218
      %v1240 = vmul.u32.u64.compose %v1239, 3817748708
      %v1241 = vextract.low.u32 %v1240
      %v1242 = vextract.high.u32 %v1240
      %v1243 = vshrl.u32 %v1242, 4
      %v1244 = vmul.u32 %v1243, 18
      %v1245 = vsub.s32 %v1239, %v1244
      %v1246 = vsub.s32 0, %v1245
      %v1247 = vsel %vm1237, %v1246, %v1245
      %vm1248 = vcmp.lt.s32.totalorder %v1219, 0
      %v1249 = vsub.s32 0, %v1219
      %v1250 = vsel %vm1248, %v1249, %v1219
      %v1251 = vmul.u32.u64.compose %v1250, 3817748708
      %v1252 = vextract.low.u32 %v1251
      %v1253 = vextract.high.u32 %v1251
      %v1254 = vshrl.u32 %v1253, 4
      %v1255 = vmul.u32 %v1254, 18
      %v1256 = vsub.s32 %v1250, %v1255
      %v1257 = vsub.s32 0, %v1256
      %v1258 = vsel %vm1248, %v1257, %v1256
      %vm1259 = vcmp.lt.s32.totalorder %v1220, 0
      %v1260 = vsub.s32 0, %v1220
      %v1261 = vsel %vm1259, %v1260, %v1220
      %v1262 = vmul.u32.u64.compose %v1261, 3817748708
      %v1263 = vextract.low.u32 %v1262
      %v1264 = vextract.high.u32 %v1262
      %v1265 = vshrl.u32 %v1264, 4
      %v1266 = vmul.u32 %v1265, 18
      %v1267 = vsub.s32 %v1261, %v1266
      %v1268 = vsub.s32 0, %v1267
      %v1269 = vsel %vm1259, %v1268, %v1267
      %vm1270 = vcmp.lt.s32.totalorder %v1221, 0
      %v1271 = vsub.s32 0, %v1221
      %v1272 = vsel %vm1270, %v1271, %v1221
      %v1273 = vmul.u32.u64.compose %v1272, 3817748708
      %v1274 = vextract.low.u32 %v1273
      %v1275 = vextract.high.u32 %v1273
      %v1276 = vshrl.u32 %v1275, 4
      %v1277 = vmul.u32 %v1276, 18
      %v1278 = vsub.s32 %v1272, %v1277
      %v1279 = vsub.s32 0, %v1278
      %v1280 = vsel %vm1270, %v1279, %v1278
      %vm1281 = vcmp.lt.s32.totalorder %v1222, 0
      %v1282 = vsub.s32 0, %v1222
      %v1283 = vsel %vm1281, %v1282, %v1222
      %v1284 = vmul.u32.u64.compose %v1283, 3817748708
      %v1285 = vextract.low.u32 %v1284
      %v1286 = vextract.high.u32 %v1284
      %v1287 = vshrl.u32 %v1286, 4
      %v1288 = vmul.u32 %v1287, 18
      %v1289 = vsub.s32 %v1283, %v1288
      %v1290 = vsub.s32 0, %v1289
      %v1291 = vsel %vm1281, %v1290, %v1289
      %vm1292 = vcmp.lt.s32.totalorder %v1223, 0
      %v1293 = vsub.s32 0, %v1223
      %v1294 = vsel %vm1292, %v1293, %v1223
      %v1295 = vmul.u32.u64.compose %v1294, 3817748708
      %v1296 = vextract.low.u32 %v1295
      %v1297 = vextract.high.u32 %v1295
      %v1298 = vshrl.u32 %v1297, 4
      %v1299 = vmul.u32 %v1298, 18
      %v1300 = vsub.s32 %v1294, %v1299
      %v1301 = vsub.s32 0, %v1300
      %v1302 = vsel %vm1292, %v1301, %v1300
      %vm1303 = vcmp.lt.s32.totalorder %v1224, 0
      %v1304 = vsub.s32 0, %v1224
      %v1305 = vsel %vm1303, %v1304, %v1224
      %v1306 = vmul.u32.u64.compose %v1305, 3817748708
      %v1307 = vextract.low.u32 %v1306
      %v1308 = vextract.high.u32 %v1306
      %v1309 = vshrl.u32 %v1308, 4
      %v1310 = vmul.u32 %v1309, 18
      %v1311 = vsub.s32 %v1305, %v1310
      %v1312 = vsub.s32 0, %v1311
      %v1313 = vsel %vm1303, %v1312, %v1311
      %vm1314 = vcmp.lt.s32.totalorder %v1225, 0
      %v1315 = vsub.s32 0, %v1225
      %v1316 = vsel %vm1314, %v1315, %v1225
      %v1317 = vmul.u32.u64.compose %v1316, 3817748708
      %v1318 = vextract.low.u32 %v1317
      %v1319 = vextract.high.u32 %v1317
      %v1320 = vshrl.u32 %v1319, 4
      %v1321 = vmul.u32 %v1320, 18
      %v1322 = vsub.s32 %v1316, %v1321
      %v1323 = vsub.s32 0, %v1322
      %v1324 = vsel %vm1314, %v1323, %v1322
      %vm1325 = vcmp.ne.s32.totalorder %v1236, 0
      %vm1326 = vcmp.ne.s32.totalorder %v1247, 0
      %vm1327 = vcmp.ne.s32.totalorder %v1258, 0
      %vm1328 = vcmp.ne.s32.totalorder %v1269, 0
      %vm1329 = vcmp.ne.s32.totalorder %v1280, 0
      %vm1330 = vcmp.ne.s32.totalorder %v1291, 0
      %vm1331 = vcmp.ne.s32.totalorder %v1302, 0
      %vm1332 = vcmp.ne.s32.totalorder %v1313, 0
      %vm1333 = vcmp.ne.s32.totalorder %v1324, 0
      %vm1334 = vcmp.lt.s32.totalorder %v1236, 0
      %vm1335 = vcmp.lt.s32.totalorder %v1247, 0
      %vm1336 = vcmp.lt.s32.totalorder %v1258, 0
      %vm1337 = vcmp.lt.s32.totalorder %v1269, 0
      %vm1338 = vcmp.lt.s32.totalorder %v1280, 0
      %vm1339 = vcmp.lt.s32.totalorder %v1291, 0
      %vm1340 = vcmp.lt.s32.totalorder %v1302, 0
      %vm1341 = vcmp.lt.s32.totalorder %v1313, 0
      %vm1342 = vcmp.lt.s32.totalorder %v1324, 0
      %vm1343 = vmand %vm1334, %vm1325
      %vm1344 = vmand %vm1335, %vm1326
      %vm1345 = vmand %vm1336, %vm1327
      %vm1346 = vmand %vm1337, %vm1328
      %vm1347 = vmand %vm1338, %vm1329
      %vm1348 = vmand %vm1339, %vm1330
      %vm1349 = vmand %vm1340, %vm1331
      %vm1350 = vmand %vm1341, %vm1332
      %vm1351 = vmand %vm1342, %vm1333
      %v1352 = vadd.s32 %v1236, 18
      %v1353 = vadd.s32 %v1247, 18
      %v1354 = vadd.s32 %v1258, 18
      %v1355 = vadd.s32 %v1269, 18
      %v1356 = vadd.s32 %v1280, 18
      %v1357 = vadd.s32 %v1291, 18
      %v1358 = vadd.s32 %v1302, 18
      %v1359 = vadd.s32 %v1313, 18
      %v1360 = vadd.s32 %v1324, 18
      %v1361 = vsel %vm1343, %v1352, %v1236
      %v1362 = vsel %vm1344, %v1353, %v1247
      %v1363 = vsel %vm1345, %v1354, %v1258
      %v1364 = vsel %vm1346, %v1355, %v1269
      %v1365 = vsel %vm1347, %v1356, %v1280
      %v1366 = vsel %vm1348, %v1357, %v1291
      %v1367 = vsel %vm1349, %v1358, %v1302
      %v1368 = vsel %vm1350, %v1359, %v1313
      %v1369 = vsel %vm1351, %v1360, %v1324
      %vm1370 = vcmp.lt.s32.totalorder %v1361, 16
      %vm1371 = vcmp.lt.s32.totalorder %v1362, 16
      %vm1372 = vcmp.lt.s32.totalorder %v1363, 16
      %vm1373 = vcmp.lt.s32.totalorder %v1364, 16
      %vm1374 = vcmp.lt.s32.totalorder %v1365, 16
      %vm1375 = vcmp.lt.s32.totalorder %v1366, 16
      %vm1376 = vcmp.lt.s32.totalorder %v1367, 16
      %vm1377 = vcmp.lt.s32.totalorder %v1368, 16
      %vm1378 = vcmp.lt.s32.totalorder %v1369, 16
      %v1379 = vsel %vm1370, 1, 0
      %v1380 = vsel %vm1371, 1, 0
      %v1381 = vsel %vm1372, 1, 0
      %v1382 = vsel %vm1373, 1, 0
      %v1383 = vsel %vm1374, 1, 0
      %v1384 = vsel %vm1375, 1, 0
      %v1385 = vsel %vm1376, 1, 0
      %v1386 = vsel %vm1377, 1, 0
      %v1387 = vsel %vm1378, 1, 0
      %v1388 = vcvt.s32.f32 %v1379
      %v1389 = vcvt.s32.f32 %v1380
      %v1390 = vcvt.s32.f32 %v1381
      %v1391 = vcvt.s32.f32 %v1382
      %v1392 = vcvt.s32.f32 %v1383
      %v1393 = vcvt.s32.f32 %v1384
      %v1394 = vcvt.s32.f32 %v1385
      %v1395 = vcvt.s32.f32 %v1386
      %v1396 = vcvt.s32.f32 %v1387
      %v1397 = vmul.f32 %v1207, %v1388
      %v1398 = vmul.f32 %v1208, %v1389
      %v1399 = vmul.f32 %v1209, %v1390
      %v1400 = vmul.f32 %v1210, %v1391
      %v1401 = vmul.f32 %v1211, %v1392
      %v1402 = vmul.f32 %v1212, %v1393
      %v1403 = vmul.f32 %v1213, %v1394
      %v1404 = vmul.f32 %v1214, %v1395
      %v1405 = vmul.f32 %v1215, %v1396
      %v1406 = vadd.f32 %v1397, %v1398
      %v1407 = vadd.f32 %v1406, %v1399
      %v1408 = vadd.f32 %v1407, %v1400
      %v1409 = vadd.f32 %v1408, %v1401
      %v1410 = vadd.f32 %v1409, %v1402
      %v1411 = vadd.f32 %v1410, %v1403
      %v1412 = vadd.f32 %v1411, %v1404
      %v1413 = vadd.f32 %v1412, %v1405
      %v1414 = vrot.slane %v1413, 4
      %v1415 = vadd.f32 %v1413, %v1414
      %v1416 = vrot.slane %v1415, 2
      %v1417 = vadd.f32 %v1415, %v1416
      %v1418 = vrot.slane %v1417, 1
      %v1419 = vadd.f32 %v1417, %v1418
      %v1420 = vmul.f32 %v1397, %v1207
      %v1421 = vmul.f32 %v1398, %v1208
      %v1422 = vmul.f32 %v1399, %v1209
      %v1423 = vmul.f32 %v1400, %v1210
      %v1424 = vmul.f32 %v1401, %v1211
      %v1425 = vmul.f32 %v1402, %v1212
      %v1426 = vmul.f32 %v1403, %v1213
      %v1427 = vmul.f32 %v1404, %v1214
      %v1428 = vmul.f32 %v1405, %v1215
      %v1429 = vadd.f32 %v1420, %v1421
      %v1430 = vadd.f32 %v1429, %v1422
      %v1431 = vadd.f32 %v1430, %v1423
      %v1432 = vadd.f32 %v1431, %v1424
      %v1433 = vadd.f32 %v1432, %v1425
      %v1434 = vadd.f32 %v1433, %v1426
      %v1435 = vadd.f32 %v1434, %v1427
      %v1436 = vadd.f32 %v1435, %v1428
      %v1437 = vrot.slane %v1436, 4
      %v1438 = vadd.f32 %v1436, %v1437
      %v1439 = vrot.slane %v1438, 2
      %v1440 = vadd.f32 %v1438, %v1439
      %v1441 = vrot.slane %v1440, 1
      %v1442 = vadd.f32 %v1440, %v1441
      %vm1443 = vcmask 1040384
      %v1444 = vsel %vm1443, %v1419, %v1442
      %1445 = vst [vmem:[%s177] sm:$0x3] %v1444
      %p1446 = scmp.lt.s32.totalorder %s17, 1
      %s1447 = scalar_select %p1446, %s17, 1
      %p1448 = scmp.lt.s32.totalorder %s18, 3
      %s1449 = scalar_select %p1448, %s18, 3
      %s1450 = smul.addr %s1447, 4
      %s1451 = sadd.s32 %s1449, %s1450
      %s1452 = smul.addr %s1451, 2
      %s1453 = scalar_lea.vmem %s2, %s1452
      // Predicated region
      $region29: #{cbr_forward.2} parent=27 // pred_check
        %p1454 = pneg %p94
      $region30: #{cbr_forward.2} parent=27 // pred_check_branch
        %1456 = sbr.rel (%p1454) target = $region32
      $region31: #{cbr_forward.2} parent=27 // pred_region
        _
      $region32: #{cbr_forward.2} parent=27 // pred_fallthru
        _
    $region28: #{cbr_forward.2} parent=5 // pred_fallthru
      _
    %p1457 = scmp.le.s32.totalorder 2, %s8
    // Predicated region
    $region33: #{cbr_forward.2} parent=5 // pred_check
      %p1458 = pneg %p1457
    $region34: #{cbr_forward.2} parent=5 // pred_check_branch
      %1460 = sbr.rel (%p1458) target = $region36
    $region35: #{cbr_forward.2} parent=5 // pred_region
      %s1461 = ssub.s32 %s8, 2
      // Predicated region
      $region37: #{cbr_forward.2} parent=35 // pred_check
        %p1462 = pneg %p100
      $region38: #{cbr_forward.2} parent=35 // pred_check_branch
        %1464 = sbr.rel (%p1462) target = $region40
      $region39: #{cbr_forward.2} parent=35 // pred_region
        %p1465 = scmp.lt.s32.totalorder %s19, 1
        %s1466 = scalar_select %p1465, %s19, 1
        %p1467 = scmp.lt.s32.totalorder %s20, 3
        %s1468 = scalar_select %p1467, %s20, 3
        %s1469 = smul.addr %s1466, 4
        %s1470 = sadd.s32 %s1468, %s1469
        %s1471 = smul.addr %s1470, 2
        %s1472 = scalar_lea.vmem %s2, %s1471
      $region40: #{cbr_forward.2} parent=35 // pred_fallthru
        _
    $region36: #{cbr_forward.2} parent=5 // pred_fallthru
      _
  $region6: #{cbr_forward.2} parent=0 // loop_footer
    %s12 = sadd.s32 1, %s8
  $region7: #{cbr_forward.2} parent=0 // loop_footer_branch
    %7 = sbr.rel target = $region3
  $region8: #{cbr_forward.2} parent=0 // loop_exit
    _

</llo_original>
